<compile_context>
chip_gen: v6e
topology: v6e:2x2x1
jax: 0.10.0
libtpu: 0.0.40
codegen_flags: <defaults>
</compile_context>

<pallas_src>
import jax
import jax.numpy as jnp
from jax import lax
from jax.experimental import pallas as pl
from jax.experimental.pallas import tpu as pltpu

NUM_CHARS = 256
MAXOCLASSES = 18
MAX_GLYPH = 5976

LETTERS_DIM = 16
OCLASSES_DIM = 16
EMB_SUM = LETTERS_DIM + OCLASSES_DIM   # item_emb_dims.sum = 32
HIDDEN_DIM = 32
OCL_ROWS = 32                          # MAXOCLASSES + 1 = 19, zero-padded to 32 rows


def _round_up(x, m):
    return -(-x // m) * m


def _inv_kernel(lett_ref, ocls_ref, lwb_ref, ow_ref, w_inv_ref, b_inv_ref,
                items_ref, inv_ref):
    """In-kernel embedding gather (one-hot on MXU) + FC_item + mask + item-sum + FC_inv.

    lett_ref, ocls_ref : (TB, N) int32 inventory indices (pipelined over batch)
    lwb_ref            : (256, D) f32  letters_table @ w_item[:16] + b_item   (resident)
    ow_ref             : (32, D)  f32  oclasses_table @ w_item[16:], zero-pad (resident)
    w_inv_ref, b_inv_ref : (D, H), (1, H)                                     (resident)
    items_ref          : (TB, N*D) f32  == relu(FC_item(x)) * ~invalid   (module output)
    inv_ref            : (TB, H)   f32  == relu(items.sum(1) @ w_inv + b_inv)
    """
    TB, n_items = lett_ref.shape
    lett = lett_ref[...]                           # (TB, N) int32
    ocls = ocls_ref[...]
    lwb = lwb_ref[...]                             # hoisted table loads
    ow = ow_ref[...]

    # Hoisted iotas (JAX does not CSE broadcast_in_dim; keep them out of the loop).
    iota_l = lax.broadcasted_iota(jnp.int32, (TB, NUM_CHARS), 1)
    iota_o = lax.broadcasted_iota(jnp.int32, (TB, OCL_ROWS), 1)

    acc = jnp.zeros((TB, EMB_SUM), jnp.float32)
    for n in range(n_items):                       # static unroll; N is small
        l = lett[:, n:n + 1]                       # (TB, 1)
        o = ocls[:, n:n + 1]
        oh_l = (iota_l == l).astype(jnp.float32)   # (TB, 256) one-hot
        oh_o = (iota_o == o).astype(jnp.float32)   # (TB, 32)  one-hot
        # Gather + FC_item fold on the MXU: exactly letters_wb[l] + oclasses_w[o].
        pre = (jnp.dot(oh_l, lwb, preferred_element_type=jnp.float32)
               + jnp.dot(oh_o, ow, preferred_element_type=jnp.float32))
        valid = (l != NUM_CHARS - 1).astype(jnp.float32)
        itm = jnp.maximum(pre, 0.0) * valid        # relu(FC_item(x)) * ~invalid_mask
        items_ref[:, n * EMB_SUM:(n + 1) * EMB_SUM] = itm
        acc = acc + itm                            # items.sum(1) accumulated per slot
    inv = jnp.dot(acc, w_inv_ref[...], preferred_element_type=jnp.float32) + b_inv_ref[...]
    inv_ref[...] = jnp.maximum(inv, 0.0)           # FC_inv ReLU


def fold_params(params):
    """One-time parameter folding. Call once and cache alongside params (review #6)."""
    lwb = (jnp.dot(params["letters_table"], params["w_item"][:LETTERS_DIM, :])
           + params["b_item"]).astype(jnp.float32)                              # (256, D)
    ow = jnp.dot(params["oclasses_table"],
                 params["w_item"][LETTERS_DIM:, :]).astype(jnp.float32)         # (19, D)
    ow = jnp.pad(ow, ((0, OCL_ROWS - ow.shape[0]), (0, 0)))                     # (32, D)
    return {
        "letters_wb": lwb,
        "oclasses_w": ow,
        "w_inv": params["w_inv"].astype(jnp.float32),
        "b_inv": params["b_inv"].reshape(1, -1).astype(jnp.float32),
    }


def inv_base_forward(folded, inv_glyphs, inv_letters, inv_oclasses, inv_strs):
    """(T, B', N), (B, N), (B, N), (B, N, L) -> (B, H), (B, N, D), (B, N)"""
    del inv_glyphs, inv_strs  # glyphs/strs embedding dims are 0 in this config
    B, N = inv_letters.shape
    D = EMB_SUM
    H = folded["w_inv"].shape[1]

    invalid_mask = inv_letters == (NUM_CHARS - 1)                # (B, N) bool

    lett = inv_letters.astype(jnp.int32)
    ocls = inv_oclasses.astype(jnp.int32)

    # Batch tiling: >= 2 grid steps whenever possible (v7x megacore + DMA pipelining),
    # tile up to 1024 rows to amortize the per-step overhead on large batches.
    b8 = _round_up(B, 8)
    if b8 <= 8:
        TB = b8
    else:
        TB = min(1024, _round_up(b8 // 2, 8))
    B_pad = _round_up(b8, TB)
    if B_pad != B:
        pad = B_pad - B
        # Pad letters with the invalid sentinel so padded rows produce zero items.
        lett = jnp.pad(lett, ((0, pad), (0, 0)), constant_values=NUM_CHARS - 1)
        ocls = jnp.pad(ocls, ((0, pad), (0, 0)))

    grid = (B_pad // TB,)
    items2d, inv_emb = pl.pallas_call(
        _inv_kernel,
        out_shape=(jax.ShapeDtypeStruct((B_pad, N * D), jnp.float32),
                   jax.ShapeDtypeStruct((B_pad, H), jnp.float32)),
        grid=grid,
        in_specs=[pl.BlockSpec((TB, N), lambda i: (i, 0)),           # letters idx (pipelined)
                  pl.BlockSpec((TB, N), lambda i: (i, 0)),           # oclasses idx (pipelined)
                  pl.BlockSpec((NUM_CHARS, D), lambda i: (0, 0)),    # folded letters table (resident)
                  pl.BlockSpec((OCL_ROWS, D), lambda i: (0, 0)),     # folded oclasses table (resident)
                  pl.BlockSpec((D, H), lambda i: (0, 0)),            # w_inv (resident)
                  pl.BlockSpec((1, H), lambda i: (0, 0))],           # b_inv (resident)
        out_specs=(pl.BlockSpec((TB, N * D), lambda i: (i, 0)),      # items: lane-dense (B, 256)
                   pl.BlockSpec((TB, H), lambda i: (i, 0))),
        compiler_params=pltpu.CompilerParams(
            dimension_semantics=("parallel",)),                      # megacore on v7x
    )(lett, ocls, folded["letters_wb"], folded["oclasses_w"],
      folded["w_inv"], folded["b_inv"])

    items_emb = items2d[:B].reshape(B, N, D)
    inv_emb = inv_emb[:B]
    return inv_emb, items_emb, invalid_mask


def make_params(key):
    ks = jax.random.split(key, 6)
    return {
        "letters_table": 0.1 * jax.random.normal(ks[0], (NUM_CHARS, LETTERS_DIM), jnp.float32),
        "oclasses_table": 0.1 * jax.random.normal(ks[1], (MAXOCLASSES + 1, OCLASSES_DIM), jnp.float32),
        "w_item": 0.1 * jax.random.normal(ks[2], (EMB_SUM, EMB_SUM), jnp.float32),
        "b_item": 0.1 * jax.random.normal(ks[3], (EMB_SUM,), jnp.float32),
        "w_inv": 0.1 * jax.random.normal(ks[4], (EMB_SUM, HIDDEN_DIM), jnp.float32),
        "b_inv": 0.1 * jax.random.normal(ks[5], (HIDDEN_DIM,), jnp.float32),
    }


def _reference_forward(params, inv_letters, inv_oclasses):
    """Pure-JAX reference of the original module's math."""
    invalid_mask = inv_letters == (NUM_CHARS - 1)
    letters_emb = jnp.take(params["letters_table"], inv_letters, axis=0)
    oclasses_emb = jnp.take(params["oclasses_table"], inv_oclasses, axis=0)
    x = jnp.concatenate([letters_emb, oclasses_emb], axis=-1)
    items = jnp.maximum(jnp.dot(x, params["w_item"]) + params["b_item"], 0.0)
    items = items * (~invalid_mask)[..., None].astype(jnp.float32)
    inv = jnp.maximum(jnp.dot(items.sum(1), params["w_inv"]) + params["b_inv"], 0.0)
    return inv, items, invalid_mask


if __name__ == "__main__":
    key = jax.random.PRNGKey(0)
    pkey, gkey, lkey, okey, skey = jax.random.split(key, 5)
    params = make_params(pkey)
    folded = fold_params(params)   # hoisted: compute once, reuse every forward call

    T, B, N, L = 1, 2, 8, 8
    inv_glyphs = jax.random.randint(gkey, (T, B, N), 0, MAX_GLYPH, jnp.int32)   # unused (glyphs dim = 0)
    inv_letters = jax.random.randint(lkey, (B, N), 97, 123, jnp.int32)
    # Mark some inventory slots invalid (letter == NUM_CHARS - 1).
    inv_letters = inv_letters.at[0, -1].set(NUM_CHARS - 1)
    inv_letters = inv_letters.at[1, -2:].set(NUM_CHARS - 1)
    inv_oclasses = jax.random.randint(okey, (B, N), 0, MAXOCLASSES + 1, jnp.int32)
    inv_strs = jax.random.randint(skey, (B, N, L), 0, 128, jnp.int32)           # unused (strs dim = 0)

    inv_emb, items_emb, invalid_mask = inv_base_forward(
        folded, inv_glyphs, inv_letters, inv_oclasses, inv_strs)
    jax.block_until_ready((inv_emb, items_emb, invalid_mask))

    assert inv_emb.shape == (B, HIDDEN_DIM)
    assert items_emb.shape == (B, N, EMB_SUM)
    assert invalid_mask.shape == (B, N)
    assert invalid_mask.dtype == jnp.bool_
    # masked items must be exactly zero
    assert float(jnp.abs(items_emb * invalid_mask[..., None]).max()) == 0.0

    # numerics vs. pure-JAX reference of the original module
    inv_ref, items_ref, mask_ref = _reference_forward(params, inv_letters, inv_oclasses)
    assert bool(jnp.all(mask_ref == invalid_mask))
    assert float(jnp.abs(items_emb - items_ref).max()) < 1e-5
    assert float(jnp.abs(inv_emb - inv_ref).max()) < 1e-5
    print("KERNEL_OK")
</pallas_src>

<mosaic_0001>
module attributes {stable_mosaic.version = 11 : i64} {
  func.func @_inv_kernel(%arg0: i32, %arg1: memref<8x8xi32, #tpu.memory_space<vmem>>, %arg2: memref<8x8xi32, #tpu.memory_space<vmem>>, %arg3: memref<256x32xf32, #tpu.memory_space<vmem>>, %arg4: memref<32x32xf32, #tpu.memory_space<vmem>>, %arg5: memref<32x32xf32, #tpu.memory_space<vmem>>, %arg6: memref<1x32xf32, #tpu.memory_space<vmem>>, %arg7: memref<8x256xf32, #tpu.memory_space<vmem>>, %arg8: memref<8x32xf32, #tpu.memory_space<vmem>>) attributes {dimension_semantics = [#tpu.dimension_semantics<parallel>], iteration_bounds = array<i64: 1>, scalar_prefetch = 0 : i64, scratch_operands = 0 : i64, tpu.core_type = #tpu.core_type<tc>, window_params = [{transform_indices = @transform_0, window_bounds = array<i64: 8, 8>}, {transform_indices = @transform_1, window_bounds = array<i64: 8, 8>}, {pipeline_mode = #tpu.pipeline_mode<synchronous>, transform_indices = @transform_2, window_bounds = array<i64: 256, 32>}, {pipeline_mode = #tpu.pipeline_mode<synchronous>, transform_indices = @transform_3, window_bounds = array<i64: 32, 32>}, {pipeline_mode = #tpu.pipeline_mode<synchronous>, transform_indices = @transform_4, window_bounds = array<i64: 32, 32>}, {pipeline_mode = #tpu.pipeline_mode<synchronous>, transform_indices = @transform_5, window_bounds = array<i64: 1, 32>}, {transform_indices = @transform_6, window_bounds = array<i64: 8, 256>}, {transform_indices = @transform_7, window_bounds = array<i64: 8, 32>}]} {
    %c0 = arith.constant 0 : index
    %c0_0 = arith.constant 0 : index
    %0 = vector.load %arg1[%c0, %c0_0] : memref<8x8xi32, #tpu.memory_space<vmem>>, vector<8x8xi32>
    %c0_1 = arith.constant 0 : index
    %c0_2 = arith.constant 0 : index
    %1 = vector.load %arg2[%c0_1, %c0_2] : memref<8x8xi32, #tpu.memory_space<vmem>>, vector<8x8xi32>
    %c0_3 = arith.constant 0 : index
    %c0_4 = arith.constant 0 : index
    %2 = vector.load %arg3[%c0_3, %c0_4] : memref<256x32xf32, #tpu.memory_space<vmem>>, vector<256x32xf32>
    %c0_5 = arith.constant 0 : index
    %c0_6 = arith.constant 0 : index
    %3 = vector.load %arg4[%c0_5, %c0_6] : memref<32x32xf32, #tpu.memory_space<vmem>>, vector<32x32xf32>
    %4 = tpu.iota {dimensions = array<i32: 1>} : vector<8x256xi32>
    %5 = tpu.iota {dimensions = array<i32: 1>} : vector<8x32xi32>
    %cst = arith.constant 0.000000e+00 : f32
    %6 = vector.broadcast %cst : f32 to vector<8x32xf32>
    %7 = vector.extract_strided_slice %0 {offsets = [0, 0], sizes = [8, 1], strides = [1, 1]} : vector<8x8xi32> to vector<8x1xi32>
    %8 = vector.extract_strided_slice %1 {offsets = [0, 0], sizes = [8, 1], strides = [1, 1]} : vector<8x8xi32> to vector<8x1xi32>
    %9 = vector.broadcast %7 : vector<8x1xi32> to vector<8x256xi32>
    %10 = arith.cmpi eq, %4, %9 : vector<8x256xi32>
    %11 = arith.extui %10 : vector<8x256xi1> to vector<8x256xi32>
    %12 = arith.sitofp %11 : vector<8x256xi32> to vector<8x256xf32>
    %13 = vector.broadcast %8 : vector<8x1xi32> to vector<8x32xi32>
    %14 = arith.cmpi eq, %5, %13 : vector<8x32xi32>
    %15 = arith.extui %14 : vector<8x32xi1> to vector<8x32xi32>
    %16 = arith.sitofp %15 : vector<8x32xi32> to vector<8x32xf32>
    %cst_7 = arith.constant dense<0.000000e+00> : vector<8x32xf32>
    %17 = tpu.matmul %12, %2, %cst_7 {dimension_numbers = #tpu.dot_dimension_numbers<[1], [0], [0], [1], [0, 0, 1, 1], [], []>} : vector<8x256xf32>, vector<256x32xf32>, vector<8x32xf32> -> vector<8x32xf32>
    %cst_8 = arith.constant dense<0.000000e+00> : vector<8x32xf32>
    %18 = tpu.matmul %16, %3, %cst_8 {dimension_numbers = #tpu.dot_dimension_numbers<[1], [0], [0], [1], [0, 0, 1, 1], [], []>} : vector<8x32xf32>, vector<32x32xf32>, vector<8x32xf32> -> vector<8x32xf32>
    %19 = arith.addf %17, %18 : vector<8x32xf32>
    %c255_i32 = arith.constant 255 : i32
    %20 = vector.broadcast %c255_i32 : i32 to vector<8x1xi32>
    %21 = arith.cmpi ne, %7, %20 : vector<8x1xi32>
    %22 = arith.extui %21 : vector<8x1xi1> to vector<8x1xi32>
    %23 = arith.sitofp %22 : vector<8x1xi32> to vector<8x1xf32>
    %cst_9 = arith.constant 0.000000e+00 : f32
    %24 = vector.broadcast %cst_9 : f32 to vector<8x32xf32>
    %25 = arith.maximumf %19, %24 : vector<8x32xf32>
    %26 = vector.broadcast %23 : vector<8x1xf32> to vector<8x32xf32>
    %27 = arith.mulf %25, %26 : vector<8x32xf32>
    %c0_10 = arith.constant 0 : index
    %c0_11 = arith.constant 0 : index
    %28 = vector.load %arg7[%c0_10, %c0_11] : memref<8x256xf32, #tpu.memory_space<vmem>>, vector<8x32xf32>
    tpu.vector_store %arg7[%c0_10, %c0_11], %27 {strides = array<i32>} : memref<8x256xf32, #tpu.memory_space<vmem>>, vector<8x32xf32>,
    %29 = arith.addf %6, %27 : vector<8x32xf32>
    %30 = vector.extract_strided_slice %0 {offsets = [0, 1], sizes = [8, 1], strides = [1, 1]} : vector<8x8xi32> to vector<8x1xi32>
    %31 = vector.extract_strided_slice %1 {offsets = [0, 1], sizes = [8, 1], strides = [1, 1]} : vector<8x8xi32> to vector<8x1xi32>
    %32 = vector.broadcast %30 : vector<8x1xi32> to vector<8x256xi32>
    %33 = arith.cmpi eq, %4, %32 : vector<8x256xi32>
    %34 = arith.extui %33 : vector<8x256xi1> to vector<8x256xi32>
    %35 = arith.sitofp %34 : vector<8x256xi32> to vector<8x256xf32>
    %36 = vector.broadcast %31 : vector<8x1xi32> to vector<8x32xi32>
    %37 = arith.cmpi eq, %5, %36 : vector<8x32xi32>
    %38 = arith.extui %37 : vector<8x32xi1> to vector<8x32xi32>
    %39 = arith.sitofp %38 : vector<8x32xi32> to vector<8x32xf32>
    %cst_12 = arith.constant dense<0.000000e+00> : vector<8x32xf32>
    %40 = tpu.matmul %35, %2, %cst_12 {dimension_numbers = #tpu.dot_dimension_numbers<[1], [0], [0], [1], [0, 0, 1, 1], [], []>} : vector<8x256xf32>, vector<256x32xf32>, vector<8x32xf32> -> vector<8x32xf32>
    %cst_13 = arith.constant dense<0.000000e+00> : vector<8x32xf32>
    %41 = tpu.matmul %39, %3, %cst_13 {dimension_numbers = #tpu.dot_dimension_numbers<[1], [0], [0], [1], [0, 0, 1, 1], [], []>} : vector<8x32xf32>, vector<32x32xf32>, vector<8x32xf32> -> vector<8x32xf32>
    %42 = arith.addf %40, %41 : vector<8x32xf32>
    %c255_i32_14 = arith.constant 255 : i32
    %43 = vector.broadcast %c255_i32_14 : i32 to vector<8x1xi32>
    %44 = arith.cmpi ne, %30, %43 : vector<8x1xi32>
    %45 = arith.extui %44 : vector<8x1xi1> to vector<8x1xi32>
    %46 = arith.sitofp %45 : vector<8x1xi32> to vector<8x1xf32>
    %cst_15 = arith.constant 0.000000e+00 : f32
    %47 = vector.broadcast %cst_15 : f32 to vector<8x32xf32>
    %48 = arith.maximumf %42, %47 : vector<8x32xf32>
    %49 = vector.broadcast %46 : vector<8x1xf32> to vector<8x32xf32>
    %50 = arith.mulf %48, %49 : vector<8x32xf32>
    %c0_16 = arith.constant 0 : index
    %c32 = arith.constant 32 : index
    %51 = vector.load %arg7[%c0_16, %c32] : memref<8x256xf32, #tpu.memory_space<vmem>>, vector<8x32xf32>
    tpu.vector_store %arg7[%c0_16, %c32], %50 {strides = array<i32>} : memref<8x256xf32, #tpu.memory_space<vmem>>, vector<8x32xf32>,
    %52 = arith.addf %29, %50 : vector<8x32xf32>
    %53 = vector.extract_strided_slice %0 {offsets = [0, 2], sizes = [8, 1], strides = [1, 1]} : vector<8x8xi32> to vector<8x1xi32>
    %54 = vector.extract_strided_slice %1 {offsets = [0, 2], sizes = [8, 1], strides = [1, 1]} : vector<8x8xi32> to vector<8x1xi32>
    %55 = vector.broadcast %53 : vector<8x1xi32> to vector<8x256xi32>
    %56 = arith.cmpi eq, %4, %55 : vector<8x256xi32>
    %57 = arith.extui %56 : vector<8x256xi1> to vector<8x256xi32>
    %58 = arith.sitofp %57 : vector<8x256xi32> to vector<8x256xf32>
    %59 = vector.broadcast %54 : vector<8x1xi32> to vector<8x32xi32>
    %60 = arith.cmpi eq, %5, %59 : vector<8x32xi32>
    %61 = arith.extui %60 : vector<8x32xi1> to vector<8x32xi32>
    %62 = arith.sitofp %61 : vector<8x32xi32> to vector<8x32xf32>
    %cst_17 = arith.constant dense<0.000000e+00> : vector<8x32xf32>
    %63 = tpu.matmul %58, %2, %cst_17 {dimension_numbers = #tpu.dot_dimension_numbers<[1], [0], [0], [1], [0, 0, 1, 1], [], []>} : vector<8x256xf32>, vector<256x32xf32>, vector<8x32xf32> -> vector<8x32xf32>
    %cst_18 = arith.constant dense<0.000000e+00> : vector<8x32xf32>
    %64 = tpu.matmul %62, %3, %cst_18 {dimension_numbers = #tpu.dot_dimension_numbers<[1], [0], [0], [1], [0, 0, 1, 1], [], []>} : vector<8x32xf32>, vector<32x32xf32>, vector<8x32xf32> -> vector<8x32xf32>
    %65 = arith.addf %63, %64 : vector<8x32xf32>
    %c255_i32_19 = arith.constant 255 : i32
    %66 = vector.broadcast %c255_i32_19 : i32 to vector<8x1xi32>
    %67 = arith.cmpi ne, %53, %66 : vector<8x1xi32>
    %68 = arith.extui %67 : vector<8x1xi1> to vector<8x1xi32>
    %69 = arith.sitofp %68 : vector<8x1xi32> to vector<8x1xf32>
    %cst_20 = arith.constant 0.000000e+00 : f32
    %70 = vector.broadcast %cst_20 : f32 to vector<8x32xf32>
    %71 = arith.maximumf %65, %70 : vector<8x32xf32>
    %72 = vector.broadcast %69 : vector<8x1xf32> to vector<8x32xf32>
    %73 = arith.mulf %71, %72 : vector<8x32xf32>
    %c0_21 = arith.constant 0 : index
    %c64 = arith.constant 64 : index
    %74 = vector.load %arg7[%c0_21, %c64] : memref<8x256xf32, #tpu.memory_space<vmem>>, vector<8x32xf32>
    tpu.vector_store %arg7[%c0_21, %c64], %73 {strides = array<i32>} : memref<8x256xf32, #tpu.memory_space<vmem>>, vector<8x32xf32>,
    %75 = arith.addf %52, %73 : vector<8x32xf32>
    %76 = vector.extract_strided_slice %0 {offsets = [0, 3], sizes = [8, 1], strides = [1, 1]} : vector<8x8xi32> to vector<8x1xi32>
    %77 = vector.extract_strided_slice %1 {offsets = [0, 3], sizes = [8, 1], strides = [1, 1]} : vector<8x8xi32> to vector<8x1xi32>
    %78 = vector.broadcast %76 : vector<8x1xi32> to vector<8x256xi32>
    %79 = arith.cmpi eq, %4, %78 : vector<8x256xi32>
    %80 = arith.extui %79 : vector<8x256xi1> to vector<8x256xi32>
    %81 = arith.sitofp %80 : vector<8x256xi32> to vector<8x256xf32>
    %82 = vector.broadcast %77 : vector<8x1xi32> to vector<8x32xi32>
    %83 = arith.cmpi eq, %5, %82 : vector<8x32xi32>
    %84 = arith.extui %83 : vector<8x32xi1> to vector<8x32xi32>
    %85 = arith.sitofp %84 : vector<8x32xi32> to vector<8x32xf32>
    %cst_22 = arith.constant dense<0.000000e+00> : vector<8x32xf32>
    %86 = tpu.matmul %81, %2, %cst_22 {dimension_numbers = #tpu.dot_dimension_numbers<[1], [0], [0], [1], [0, 0, 1, 1], [], []>} : vector<8x256xf32>, vector<256x32xf32>, vector<8x32xf32> -> vector<8x32xf32>
    %cst_23 = arith.constant dense<0.000000e+00> : vector<8x32xf32>
    %87 = tpu.matmul %85, %3, %cst_23 {dimension_numbers = #tpu.dot_dimension_numbers<[1], [0], [0], [1], [0, 0, 1, 1], [], []>} : vector<8x32xf32>, vector<32x32xf32>, vector<8x32xf32> -> vector<8x32xf32>
    %88 = arith.addf %86, %87 : vector<8x32xf32>
    %c255_i32_24 = arith.constant 255 : i32
    %89 = vector.broadcast %c255_i32_24 : i32 to vector<8x1xi32>
    %90 = arith.cmpi ne, %76, %89 : vector<8x1xi32>
    %91 = arith.extui %90 : vector<8x1xi1> to vector<8x1xi32>
    %92 = arith.sitofp %91 : vector<8x1xi32> to vector<8x1xf32>
    %cst_25 = arith.constant 0.000000e+00 : f32
    %93 = vector.broadcast %cst_25 : f32 to vector<8x32xf32>
    %94 = arith.maximumf %88, %93 : vector<8x32xf32>
    %95 = vector.broadcast %92 : vector<8x1xf32> to vector<8x32xf32>
    %96 = arith.mulf %94, %95 : vector<8x32xf32>
    %c0_26 = arith.constant 0 : index
    %c96 = arith.constant 96 : index
    %97 = vector.load %arg7[%c0_26, %c96] : memref<8x256xf32, #tpu.memory_space<vmem>>, vector<8x32xf32>
    tpu.vector_store %arg7[%c0_26, %c96], %96 {strides = array<i32>} : memref<8x256xf32, #tpu.memory_space<vmem>>, vector<8x32xf32>,
    %98 = arith.addf %75, %96 : vector<8x32xf32>
    %99 = vector.extract_strided_slice %0 {offsets = [0, 4], sizes = [8, 1], strides = [1, 1]} : vector<8x8xi32> to vector<8x1xi32>
    %100 = vector.extract_strided_slice %1 {offsets = [0, 4], sizes = [8, 1], strides = [1, 1]} : vector<8x8xi32> to vector<8x1xi32>
    %101 = vector.broadcast %99 : vector<8x1xi32> to vector<8x256xi32>
    %102 = arith.cmpi eq, %4, %101 : vector<8x256xi32>
    %103 = arith.extui %102 : vector<8x256xi1> to vector<8x256xi32>
    %104 = arith.sitofp %103 : vector<8x256xi32> to vector<8x256xf32>
    %105 = vector.broadcast %100 : vector<8x1xi32> to vector<8x32xi32>
    %106 = arith.cmpi eq, %5, %105 : vector<8x32xi32>
    %107 = arith.extui %106 : vector<8x32xi1> to vector<8x32xi32>
    %108 = arith.sitofp %107 : vector<8x32xi32> to vector<8x32xf32>
    %cst_27 = arith.constant dense<0.000000e+00> : vector<8x32xf32>
    %109 = tpu.matmul %104, %2, %cst_27 {dimension_numbers = #tpu.dot_dimension_numbers<[1], [0], [0], [1], [0, 0, 1, 1], [], []>} : vector<8x256xf32>, vector<256x32xf32>, vector<8x32xf32> -> vector<8x32xf32>
    %cst_28 = arith.constant dense<0.000000e+00> : vector<8x32xf32>
    %110 = tpu.matmul %108, %3, %cst_28 {dimension_numbers = #tpu.dot_dimension_numbers<[1], [0], [0], [1], [0, 0, 1, 1], [], []>} : vector<8x32xf32>, vector<32x32xf32>, vector<8x32xf32> -> vector<8x32xf32>
    %111 = arith.addf %109, %110 : vector<8x32xf32>
    %c255_i32_29 = arith.constant 255 : i32
    %112 = vector.broadcast %c255_i32_29 : i32 to vector<8x1xi32>
    %113 = arith.cmpi ne, %99, %112 : vector<8x1xi32>
    %114 = arith.extui %113 : vector<8x1xi1> to vector<8x1xi32>
    %115 = arith.sitofp %114 : vector<8x1xi32> to vector<8x1xf32>
    %cst_30 = arith.constant 0.000000e+00 : f32
    %116 = vector.broadcast %cst_30 : f32 to vector<8x32xf32>
    %117 = arith.maximumf %111, %116 : vector<8x32xf32>
    %118 = vector.broadcast %115 : vector<8x1xf32> to vector<8x32xf32>
    %119 = arith.mulf %117, %118 : vector<8x32xf32>
    %c0_31 = arith.constant 0 : index
    %c128 = arith.constant 128 : index
    %120 = vector.load %arg7[%c0_31, %c128] : memref<8x256xf32, #tpu.memory_space<vmem>>, vector<8x32xf32>
    tpu.vector_store %arg7[%c0_31, %c128], %119 {strides = array<i32>} : memref<8x256xf32, #tpu.memory_space<vmem>>, vector<8x32xf32>,
    %121 = arith.addf %98, %119 : vector<8x32xf32>
    %122 = vector.extract_strided_slice %0 {offsets = [0, 5], sizes = [8, 1], strides = [1, 1]} : vector<8x8xi32> to vector<8x1xi32>
    %123 = vector.extract_strided_slice %1 {offsets = [0, 5], sizes = [8, 1], strides = [1, 1]} : vector<8x8xi32> to vector<8x1xi32>
    %124 = vector.broadcast %122 : vector<8x1xi32> to vector<8x256xi32>
    %125 = arith.cmpi eq, %4, %124 : vector<8x256xi32>
    %126 = arith.extui %125 : vector<8x256xi1> to vector<8x256xi32>
    %127 = arith.sitofp %126 : vector<8x256xi32> to vector<8x256xf32>
    %128 = vector.broadcast %123 : vector<8x1xi32> to vector<8x32xi32>
    %129 = arith.cmpi eq, %5, %128 : vector<8x32xi32>
    %130 = arith.extui %129 : vector<8x32xi1> to vector<8x32xi32>
    %131 = arith.sitofp %130 : vector<8x32xi32> to vector<8x32xf32>
    %cst_32 = arith.constant dense<0.000000e+00> : vector<8x32xf32>
    %132 = tpu.matmul %127, %2, %cst_32 {dimension_numbers = #tpu.dot_dimension_numbers<[1], [0], [0], [1], [0, 0, 1, 1], [], []>} : vector<8x256xf32>, vector<256x32xf32>, vector<8x32xf32> -> vector<8x32xf32>
    %cst_33 = arith.constant dense<0.000000e+00> : vector<8x32xf32>
    %133 = tpu.matmul %131, %3, %cst_33 {dimension_numbers = #tpu.dot_dimension_numbers<[1], [0], [0], [1], [0, 0, 1, 1], [], []>} : vector<8x32xf32>, vector<32x32xf32>, vector<8x32xf32> -> vector<8x32xf32>
    %134 = arith.addf %132, %133 : vector<8x32xf32>
    %c255_i32_34 = arith.constant 255 : i32
    %135 = vector.broadcast %c255_i32_34 : i32 to vector<8x1xi32>
    %136 = arith.cmpi ne, %122, %135 : vector<8x1xi32>
    %137 = arith.extui %136 : vector<8x1xi1> to vector<8x1xi32>
    %138 = arith.sitofp %137 : vector<8x1xi32> to vector<8x1xf32>
    %cst_35 = arith.constant 0.000000e+00 : f32
    %139 = vector.broadcast %cst_35 : f32 to vector<8x32xf32>
    %140 = arith.maximumf %134, %139 : vector<8x32xf32>
    %141 = vector.broadcast %138 : vector<8x1xf32> to vector<8x32xf32>
    %142 = arith.mulf %140, %141 : vector<8x32xf32>
    %c0_36 = arith.constant 0 : index
    %c160 = arith.constant 160 : index
    %143 = vector.load %arg7[%c0_36, %c160] : memref<8x256xf32, #tpu.memory_space<vmem>>, vector<8x32xf32>
    tpu.vector_store %arg7[%c0_36, %c160], %142 {strides = array<i32>} : memref<8x256xf32, #tpu.memory_space<vmem>>, vector<8x32xf32>,
    %144 = arith.addf %121, %142 : vector<8x32xf32>
    %145 = vector.extract_strided_slice %0 {offsets = [0, 6], sizes = [8, 1], strides = [1, 1]} : vector<8x8xi32> to vector<8x1xi32>
    %146 = vector.extract_strided_slice %1 {offsets = [0, 6], sizes = [8, 1], strides = [1, 1]} : vector<8x8xi32> to vector<8x1xi32>
    %147 = vector.broadcast %145 : vector<8x1xi32> to vector<8x256xi32>
    %148 = arith.cmpi eq, %4, %147 : vector<8x256xi32>
    %149 = arith.extui %148 : vector<8x256xi1> to vector<8x256xi32>
    %150 = arith.sitofp %149 : vector<8x256xi32> to vector<8x256xf32>
    %151 = vector.broadcast %146 : vector<8x1xi32> to vector<8x32xi32>
    %152 = arith.cmpi eq, %5, %151 : vector<8x32xi32>
    %153 = arith.extui %152 : vector<8x32xi1> to vector<8x32xi32>
    %154 = arith.sitofp %153 : vector<8x32xi32> to vector<8x32xf32>
    %cst_37 = arith.constant dense<0.000000e+00> : vector<8x32xf32>
    %155 = tpu.matmul %150, %2, %cst_37 {dimension_numbers = #tpu.dot_dimension_numbers<[1], [0], [0], [1], [0, 0, 1, 1], [], []>} : vector<8x256xf32>, vector<256x32xf32>, vector<8x32xf32> -> vector<8x32xf32>
    %cst_38 = arith.constant dense<0.000000e+00> : vector<8x32xf32>
    %156 = tpu.matmul %154, %3, %cst_38 {dimension_numbers = #tpu.dot_dimension_numbers<[1], [0], [0], [1], [0, 0, 1, 1], [], []>} : vector<8x32xf32>, vector<32x32xf32>, vector<8x32xf32> -> vector<8x32xf32>
    %157 = arith.addf %155, %156 : vector<8x32xf32>
    %c255_i32_39 = arith.constant 255 : i32
    %158 = vector.broadcast %c255_i32_39 : i32 to vector<8x1xi32>
    %159 = arith.cmpi ne, %145, %158 : vector<8x1xi32>
    %160 = arith.extui %159 : vector<8x1xi1> to vector<8x1xi32>
    %161 = arith.sitofp %160 : vector<8x1xi32> to vector<8x1xf32>
    %cst_40 = arith.constant 0.000000e+00 : f32
    %162 = vector.broadcast %cst_40 : f32 to vector<8x32xf32>
    %163 = arith.maximumf %157, %162 : vector<8x32xf32>
    %164 = vector.broadcast %161 : vector<8x1xf32> to vector<8x32xf32>
    %165 = arith.mulf %163, %164 : vector<8x32xf32>
    %c0_41 = arith.constant 0 : index
    %c192 = arith.constant 192 : index
    %166 = vector.load %arg7[%c0_41, %c192] : memref<8x256xf32, #tpu.memory_space<vmem>>, vector<8x32xf32>
    tpu.vector_store %arg7[%c0_41, %c192], %165 {strides = array<i32>} : memref<8x256xf32, #tpu.memory_space<vmem>>, vector<8x32xf32>,
    %167 = arith.addf %144, %165 : vector<8x32xf32>
    %168 = vector.extract_strided_slice %0 {offsets = [0, 7], sizes = [8, 1], strides = [1, 1]} : vector<8x8xi32> to vector<8x1xi32>
    %169 = vector.extract_strided_slice %1 {offsets = [0, 7], sizes = [8, 1], strides = [1, 1]} : vector<8x8xi32> to vector<8x1xi32>
    %170 = vector.broadcast %168 : vector<8x1xi32> to vector<8x256xi32>
    %171 = arith.cmpi eq, %4, %170 : vector<8x256xi32>
    %172 = arith.extui %171 : vector<8x256xi1> to vector<8x256xi32>
    %173 = arith.sitofp %172 : vector<8x256xi32> to vector<8x256xf32>
    %174 = vector.broadcast %169 : vector<8x1xi32> to vector<8x32xi32>
    %175 = arith.cmpi eq, %5, %174 : vector<8x32xi32>
    %176 = arith.extui %175 : vector<8x32xi1> to vector<8x32xi32>
    %177 = arith.sitofp %176 : vector<8x32xi32> to vector<8x32xf32>
    %cst_42 = arith.constant dense<0.000000e+00> : vector<8x32xf32>
    %178 = tpu.matmul %173, %2, %cst_42 {dimension_numbers = #tpu.dot_dimension_numbers<[1], [0], [0], [1], [0, 0, 1, 1], [], []>} : vector<8x256xf32>, vector<256x32xf32>, vector<8x32xf32> -> vector<8x32xf32>
    %cst_43 = arith.constant dense<0.000000e+00> : vector<8x32xf32>
    %179 = tpu.matmul %177, %3, %cst_43 {dimension_numbers = #tpu.dot_dimension_numbers<[1], [0], [0], [1], [0, 0, 1, 1], [], []>} : vector<8x32xf32>, vector<32x32xf32>, vector<8x32xf32> -> vector<8x32xf32>
    %180 = arith.addf %178, %179 : vector<8x32xf32>
    %c255_i32_44 = arith.constant 255 : i32
    %181 = vector.broadcast %c255_i32_44 : i32 to vector<8x1xi32>
    %182 = arith.cmpi ne, %168, %181 : vector<8x1xi32>
    %183 = arith.extui %182 : vector<8x1xi1> to vector<8x1xi32>
    %184 = arith.sitofp %183 : vector<8x1xi32> to vector<8x1xf32>
    %cst_45 = arith.constant 0.000000e+00 : f32
    %185 = vector.broadcast %cst_45 : f32 to vector<8x32xf32>
    %186 = arith.maximumf %180, %185 : vector<8x32xf32>
    %187 = vector.broadcast %184 : vector<8x1xf32> to vector<8x32xf32>
    %188 = arith.mulf %186, %187 : vector<8x32xf32>
    %c0_46 = arith.constant 0 : index
    %c224 = arith.constant 224 : index
    %189 = vector.load %arg7[%c0_46, %c224] : memref<8x256xf32, #tpu.memory_space<vmem>>, vector<8x32xf32>
    tpu.vector_store %arg7[%c0_46, %c224], %188 {strides = array<i32>} : memref<8x256xf32, #tpu.memory_space<vmem>>, vector<8x32xf32>,
    %190 = arith.addf %167, %188 : vector<8x32xf32>
    %c0_47 = arith.constant 0 : index
    %c0_48 = arith.constant 0 : index
    %191 = vector.load %arg5[%c0_47, %c0_48] : memref<32x32xf32, #tpu.memory_space<vmem>>, vector<32x32xf32>
    %cst_49 = arith.constant dense<0.000000e+00> : vector<8x32xf32>
    %192 = tpu.matmul %190, %191, %cst_49 {dimension_numbers = #tpu.dot_dimension_numbers<[1], [0], [0], [1], [0, 0, 1, 1], [], []>} : vector<8x32xf32>, vector<32x32xf32>, vector<8x32xf32> -> vector<8x32xf32>
    %c0_50 = arith.constant 0 : index
    %c0_51 = arith.constant 0 : index
    %193 = vector.load %arg6[%c0_50, %c0_51] : memref<1x32xf32, #tpu.memory_space<vmem>>, vector<1x32xf32>
    %194 = vector.broadcast %193 : vector<1x32xf32> to vector<8x32xf32>
    %195 = arith.addf %192, %194 : vector<8x32xf32>
    %cst_52 = arith.constant 0.000000e+00 : f32
    %196 = vector.broadcast %cst_52 : f32 to vector<8x32xf32>
    %197 = arith.maximumf %195, %196 : vector<8x32xf32>
    %c0_53 = arith.constant 0 : index
    %c0_54 = arith.constant 0 : index
    %198 = vector.load %arg8[%c0_53, %c0_54] : memref<8x32xf32, #tpu.memory_space<vmem>>, vector<8x32xf32>
    tpu.vector_store %arg8[%c0_53, %c0_54], %197 {strides = array<i32>} : memref<8x32xf32, #tpu.memory_space<vmem>>, vector<8x32xf32>,
    return
  }
  func.func @transform_0(%arg0: i32) -> (i32, i32) {
    %c0_i32 = arith.constant 0 : i32
    %c0_i32_0 = arith.constant 0 : i32
    return %arg0, %c0_i32 : i32, i32
  }
  func.func @transform_1(%arg0: i32) -> (i32, i32) {
    %c0_i32 = arith.constant 0 : i32
    %c0_i32_0 = arith.constant 0 : i32
    return %arg0, %c0_i32 : i32, i32
  }
  func.func @transform_2(%arg0: i32) -> (i32, i32) {
    %c0_i32 = arith.constant 0 : i32
    %c0_i32_0 = arith.constant 0 : i32
    %c0_i32_1 = arith.constant 0 : i32
    return %c0_i32, %c0_i32_0 : i32, i32
  }
  func.func @transform_3(%arg0: i32) -> (i32, i32) {
    %c0_i32 = arith.constant 0 : i32
    %c0_i32_0 = arith.constant 0 : i32
    %c0_i32_1 = arith.constant 0 : i32
    return %c0_i32, %c0_i32_0 : i32, i32
  }
  func.func @transform_4(%arg0: i32) -> (i32, i32) {
    %c0_i32 = arith.constant 0 : i32
    %c0_i32_0 = arith.constant 0 : i32
    %c0_i32_1 = arith.constant 0 : i32
    return %c0_i32, %c0_i32_0 : i32, i32
  }
  func.func @transform_5(%arg0: i32) -> (i32, i32) {
    %c0_i32 = arith.constant 0 : i32
    %c0_i32_0 = arith.constant 0 : i32
    %c0_i32_1 = arith.constant 0 : i32
    return %c0_i32, %c0_i32_0 : i32, i32
  }
  func.func @transform_6(%arg0: i32) -> (i32, i32) {
    %c0_i32 = arith.constant 0 : i32
    %c0_i32_0 = arith.constant 0 : i32
    return %arg0, %c0_i32 : i32, i32
  }
  func.func @transform_7(%arg0: i32) -> (i32, i32) {
    %c0_i32 = arith.constant 0 : i32
    %c0_i32_0 = arith.constant 0 : i32
    return %arg0, %c0_i32 : i32, i32
  }
}

</mosaic_0001>

<llo_original>
// kernel: tpu_custom_call.1
$region0: #{tpu_custom_call.1}
  #allocation0 [shape = 'u32[]', space=smem, size = 0x4, offset = 0x4, fixed_abs, tag = 'smem constant byte address 0x4 - core index']
  #allocation1 [shape = 'u32[144,128]{1,0:T(1,128)}', space=vmem, size = 0x12000, scoped, tag = 'internal scratch']
  %s0 = inlined_call_operand.vmem [shape: s32[8,8], index: 0, kind: input, shape index: {}]
  %s1 = inlined_call_operand.vmem [shape: s32[8,8], index: 1, kind: input, shape index: {}]
  %s2 = inlined_call_operand.vmem [shape: f32[256,32], index: 2, kind: input, shape index: {}]
  %s3 = inlined_call_operand.vmem [shape: f32[32,32], index: 3, kind: input, shape index: {}]
  %s4 = inlined_call_operand.vmem [shape: f32[32,32], index: 4, kind: input, shape index: {}]
  %s5 = inlined_call_operand.vmem [shape: f32[1,32], index: 5, kind: input, shape index: {}]
  %s6 = inlined_call_operand.hbm [shape: f32[8,256], index: 6, kind: output, shape index: {0}]
  %s7 = inlined_call_operand.hbm [shape: f32[8,32], index: 7, kind: output, shape index: {1}]
  %8 = xla_tuple %s6, %s7
  %s9 = sld [smem:[#allocation0]]
  $region42: #{tpu_custom_call.1} parent=0
    _
  %s11 = ssub.s32 1, %s9
  %s12 = scalar_select 0, %s11, %s9
  $region1: #{tpu_custom_call.1} parent=0
    #allocation2 [shape = 'u8[8192]{0}', space=vmem, size = 0x2000, scoped, tag = 'output window, operand 0, single buffered']
    #allocation3 [shape = 's32[1]{0}', space=sflag, size = 0x4, scoped, tag = 'scoped memory for tpu_custom_call.1']
    #allocation4 [shape = 'u8[4096]{0}', space=vmem, size = 0x1000, scoped, tag = 'output window, operand 1, single buffered']
    #allocation5 [shape = 's32[1]{0}', space=sflag, size = 0x4, scoped, tag = 'scoped memory for tpu_custom_call.1']
    %13 = vsyncpa [#allocation3], 0
    %14 = vsyncpa [#allocation5], 0
    // Predicated region
    $region2: #{tpu_custom_call.1} parent=1 // pred_check
      _
    $region3: #{tpu_custom_call.1} parent=1 // pred_check_branch
      %16 = sbr.rel (0) target = $region5
    $region4: #{tpu_custom_call.1} parent=1 // pred_region
      _
    $region5: #{tpu_custom_call.1} parent=1 // pred_fallthru
      _
    // Predicated region
    $region6: #{tpu_custom_call.1} parent=1 // pred_check
      _
    $region7: #{tpu_custom_call.1} parent=1 // pred_check_branch
      %18 = sbr.rel (0) target = $region9
    $region8: #{tpu_custom_call.1} parent=1 // pred_region
      _
    $region9: #{tpu_custom_call.1} parent=1 // pred_fallthru
      _
    // Predicated region
    $region10: #{tpu_custom_call.1} parent=1 // pred_check
      _
    $region11: #{tpu_custom_call.1} parent=1 // pred_check_branch
      %20 = sbr.rel (0) target = $region13
    $region12: #{tpu_custom_call.1} parent=1 // pred_region
      _
    $region13: #{tpu_custom_call.1} parent=1 // pred_fallthru
      _
    // Predicated region
    $region14: #{tpu_custom_call.1} parent=1 // pred_check
      _
    $region15: #{tpu_custom_call.1} parent=1 // pred_check_branch
      %22 = sbr.rel (0) target = $region17
    $region16: #{tpu_custom_call.1} parent=1 // pred_region
      _
    $region17: #{tpu_custom_call.1} parent=1 // pred_fallthru
      _
    // Predicated region
    $region18: #{tpu_custom_call.1} parent=1 // pred_check
      _
    $region19: #{tpu_custom_call.1} parent=1 // pred_check_branch
      %24 = sbr.rel (0) target = $region21
    $region20: #{tpu_custom_call.1} parent=1 // pred_region
      _
    $region21: #{tpu_custom_call.1} parent=1 // pred_fallthru
      _
    // Predicated region
    $region22: #{tpu_custom_call.1} parent=1 // pred_check
      _
    $region23: #{tpu_custom_call.1} parent=1 // pred_check_branch
      %26 = sbr.rel (0) target = $region25
    $region24: #{tpu_custom_call.1} parent=1 // pred_region
      _
    $region25: #{tpu_custom_call.1} parent=1 // pred_fallthru
      _
    %v27 = vld [vmem:[%s0] sm:$0xff]
    %v28 = vld [vmem:[%s1] sm:$0xff]
    %v29 = vld [vmem:[%s2] sm:$0xff]
    %v30 = vld [vmem:[%s2 + $0x8] sm:$0xff]
    %v31 = vld [vmem:[%s2 + $0x10] sm:$0xff]
    %v32 = vld [vmem:[%s2 + $0x18] sm:$0xff]
    %v33 = vld [vmem:[%s2 + $0x20] sm:$0xff]
    %v34 = vld [vmem:[%s2 + $0x28] sm:$0xff]
    %v35 = vld [vmem:[%s2 + $0x30] sm:$0xff]
    %v36 = vld [vmem:[%s2 + $0x38] sm:$0xff]
    %v37 = vld [vmem:[%s2 + $0x40] sm:$0xff]
    %v38 = vld [vmem:[%s2 + $0x48] sm:$0xff]
    %v39 = vld [vmem:[%s2 + $0x50] sm:$0xff]
    %v40 = vld [vmem:[%s2 + $0x58] sm:$0xff]
    %v41 = vld [vmem:[%s2 + $0x60] sm:$0xff]
    %v42 = vld [vmem:[%s2 + $0x68] sm:$0xff]
    %v43 = vld [vmem:[%s2 + $0x70] sm:$0xff]
    %v44 = vld [vmem:[%s2 + $0x78] sm:$0xff]
    %v45 = vld [vmem:[%s2 + $0x80] sm:$0xff]
    %v46 = vld [vmem:[%s2 + $0x88] sm:$0xff]
    %v47 = vld [vmem:[%s2 + $0x90] sm:$0xff]
    %v48 = vld [vmem:[%s2 + $0x98] sm:$0xff]
    %v49 = vld [vmem:[%s2 + $0xa0] sm:$0xff]
    %v50 = vld [vmem:[%s2 + $0xa8] sm:$0xff]
    %v51 = vld [vmem:[%s2 + $0xb0] sm:$0xff]
    %v52 = vld [vmem:[%s2 + $0xb8] sm:$0xff]
    %v53 = vld [vmem:[%s2 + $0xc0] sm:$0xff]
    %v54 = vld [vmem:[%s2 + $0xc8] sm:$0xff]
    %v55 = vld [vmem:[%s2 + $0xd0] sm:$0xff]
    %v56 = vld [vmem:[%s2 + $0xd8] sm:$0xff]
    %v57 = vld [vmem:[%s2 + $0xe0] sm:$0xff]
    %v58 = vld [vmem:[%s2 + $0xe8] sm:$0xff]
    %v59 = vld [vmem:[%s2 + $0xf0] sm:$0xff]
    %v60 = vld [vmem:[%s2 + $0xf8] sm:$0xff]
    %v61 = vld [vmem:[%s3] sm:$0xff]
    %v62 = vld [vmem:[%s3 + $0x8] sm:$0xff]
    %v63 = vld [vmem:[%s3 + $0x10] sm:$0xff]
    %v64 = vld [vmem:[%s3 + $0x18] sm:$0xff]
    %v65 = vlaneseq
    %v66 = vand.u32 %v65, 127
    %v67 = vadd.s32 %v66, 128
    %68 = vset.pattern.permute.xlu0 0
    %69 = vperm.xlu0 %68, %v27
    %v70 = vpop.permute.xlu0 %69
    %vm71 = vcmp.eq.s32.totalorder %v66, %v70
    %vm72 = vcmp.eq.s32.totalorder %v67, %v70
    %v73 = vsel %vm71, 1, 0
    %v74 = vsel %vm72, 1, 0
    %v75 = vcvt.s32.f32 %v73
    %v76 = vcvt.s32.f32 %v74
    %77 = vset.pattern.permute.xlu0 0
    %78 = vperm.xlu0 %77, %v28
    %v79 = vpop.permute.xlu0 %78
    %vm80 = vcmp.eq.s32.totalorder %v66, %v79
    %v81 = vsel %vm80, 1, 0
    %v82 = vcvt.s32.f32 %v81
    %vm83 = vcmask 261120
    %v85 = vsel %vm83, %v82, 0
    %87 = vmatprep.subr.mxu0 0.0
    %88 = vmatpush1.msra.mxu0 0.0
    %89 = vmatprep.subr.mxu0 0.0
    %90 = vmatpush1.msra.mxu0 0.0
    %91 = vmatprep.subr.mxu0 0.0
    %92 = vmatpush1.msra.mxu0 0.0
    %93 = vmatprep.subr.mxu0 0.0
    %94 = vmatpush1.msra.mxu0 0.0
    %95 = vmatprep.subr.mxu0 0.0
    %96 = vmatpush1.msra.mxu0 0.0
    %97 = vmatprep.subr.mxu0 0.0
    %98 = vmatpush1.msra.mxu0 0.0
    %99 = vmatprep.subr.mxu0 0.0
    %100 = vmatpush1.msra.mxu0 0.0
    %101 = vmatprep.subr.mxu0 0.0
    %102 = vmatpush1.msra.mxu0 0.0
    %103 = vmatprep.subr.mxu0 0.0
    %104 = vmatpush1.msra.mxu0 0.0
    %105 = vmatprep.subr.mxu0 0.0
    %106 = vmatpush1.msra.mxu0 0.0
    %107 = vmatprep.subr.mxu0 0.0
    %108 = vmatpush1.msra.mxu0 0.0
    %109 = vmatprep.subr.mxu0 0.0
    %110 = vmatpush1.msra.mxu0 0.0
    %111 = vmatprep.subr.mxu0 0.0
    %112 = vmatpush1.msra.mxu0 %v64
    %113 = vmatprep.subr.mxu0 0.0
    %114 = vmatpush1.msra.mxu0 %v63
    %115 = vmatprep.subr.mxu0 0.0
    %116 = vmatpush1.msra.mxu0 %v62
    %117 = vmatprep.subr.mxu0 0.0
    %118 = vmatpush1.msra.mxu0 %v61
    %119 = vmatprep.subr.mxu0 0.0
    %120 = vmatpush2.msra.mxu0 0.0
    %121 = vmatprep.subr.mxu0 0.0
    %122 = vmatpush2.msra.mxu0 0.0
    %123 = vmatprep.subr.mxu0 0.0
    %124 = vmatpush2.msra.mxu0 0.0
    %125 = vmatprep.subr.mxu0 0.0
    %126 = vmatpush2.msra.mxu0 0.0
    %127 = vmatprep.subr.mxu0 0.0
    %128 = vmatpush2.msra.mxu0 0.0
    %129 = vmatprep.subr.mxu0 0.0
    %130 = vmatpush2.msra.mxu0 0.0
    %131 = vmatprep.subr.mxu0 0.0
    %132 = vmatpush2.msra.mxu0 0.0
    %133 = vmatprep.subr.mxu0 0.0
    %134 = vmatpush2.msra.mxu0 0.0
    %135 = vmatprep.subr.mxu0 0.0
    %136 = vmatpush2.msra.mxu0 0.0
    %137 = vmatprep.subr.mxu0 0.0
    %138 = vmatpush2.msra.mxu0 0.0
    %139 = vmatprep.subr.mxu0 0.0
    %140 = vmatpush2.msra.mxu0 0.0
    %141 = vmatprep.subr.mxu0 0.0
    %142 = vmatpush2.msra.mxu0 0.0
    %143 = vmatprep.subr.mxu0 0.0
    %144 = vmatpush2.msra.mxu0 0.0
    %145 = vmatprep.subr.mxu0 0.0
    %146 = vmatpush2.msra.mxu0 0.0
    %147 = vmatprep.subr.mxu0 0.0
    %148 = vmatpush2.msra.mxu0 0.0
    %149 = vmatprep.subr.mxu0 0.0
    %150 = vmatpush2.msra.mxu0 0.0
    %151 = vmatprep.mubr.f32.mxu0 0.0
    %152 = vmatmul.mubr.f32.gmra.mxu0 %v85
    %v153 = vpop.f32.mrf.mxu0
    %v154 = vadd.f32 0.0, %v153
    %v155 = vpop.f32.mrf.mxu0
    %156 = vdwg.mxu0
    %157 = vmatprep.subr.mxu0 0.0
    %158 = vmatpush1.msra.mxu0 %v44
    %159 = vmatprep.subr.mxu0 0.0
    %160 = vmatpush1.msra.mxu0 %v43
    %161 = vmatprep.subr.mxu0 0.0
    %162 = vmatpush1.msra.mxu0 %v42
    %163 = vmatprep.subr.mxu0 0.0
    %164 = vmatpush1.msra.mxu0 %v41
    %165 = vmatprep.subr.mxu0 0.0
    %166 = vmatpush1.msra.mxu0 %v40
    %167 = vmatprep.subr.mxu0 0.0
    %168 = vmatpush1.msra.mxu0 %v39
    %169 = vmatprep.subr.mxu0 0.0
    %170 = vmatpush1.msra.mxu0 %v38
    %171 = vmatprep.subr.mxu0 0.0
    %172 = vmatpush1.msra.mxu0 %v37
    %173 = vmatprep.subr.mxu0 0.0
    %174 = vmatpush1.msra.mxu0 %v36
    %175 = vmatprep.subr.mxu0 0.0
    %176 = vmatpush1.msra.mxu0 %v35
    %177 = vmatprep.subr.mxu0 0.0
    %178 = vmatpush1.msra.mxu0 %v34
    %179 = vmatprep.subr.mxu0 0.0
    %180 = vmatpush1.msra.mxu0 %v33
    %181 = vmatprep.subr.mxu0 0.0
    %182 = vmatpush1.msra.mxu0 %v32
    %183 = vmatprep.subr.mxu0 0.0
    %184 = vmatpush1.msra.mxu0 %v31
    %185 = vmatprep.subr.mxu0 0.0
    %186 = vmatpush1.msra.mxu0 %v30
    %187 = vmatprep.subr.mxu0 0.0
    %188 = vmatpush1.msra.mxu0 %v29
    %189 = vmatprep.subr.mxu0 0.0
    %190 = vmatpush2.msra.mxu0 %v60
    %191 = vmatprep.subr.mxu0 0.0
    %192 = vmatpush2.msra.mxu0 %v59
    %193 = vmatprep.subr.mxu0 0.0
    %194 = vmatpush2.msra.mxu0 %v58
    %195 = vmatprep.subr.mxu0 0.0
    %196 = vmatpush2.msra.mxu0 %v57
    %197 = vmatprep.subr.mxu0 0.0
    %198 = vmatpush2.msra.mxu0 %v56
    %199 = vmatprep.subr.mxu0 0.0
    %200 = vmatpush2.msra.mxu0 %v55
    %201 = vmatprep.subr.mxu0 0.0
    %202 = vmatpush2.msra.mxu0 %v54
    %203 = vmatprep.subr.mxu0 0.0
    %204 = vmatpush2.msra.mxu0 %v53
    %205 = vmatprep.subr.mxu0 0.0
    %206 = vmatpush2.msra.mxu0 %v52
    %207 = vmatprep.subr.mxu0 0.0
    %208 = vmatpush2.msra.mxu0 %v51
    %209 = vmatprep.subr.mxu0 0.0
    %210 = vmatpush2.msra.mxu0 %v50
    %211 = vmatprep.subr.mxu0 0.0
    %212 = vmatpush2.msra.mxu0 %v49
    %213 = vmatprep.subr.mxu0 0.0
    %214 = vmatpush2.msra.mxu0 %v48
    %215 = vmatprep.subr.mxu0 0.0
    %216 = vmatpush2.msra.mxu0 %v47
    %217 = vmatprep.subr.mxu0 0.0
    %218 = vmatpush2.msra.mxu0 %v46
    %219 = vmatprep.subr.mxu0 0.0
    %220 = vmatpush2.msra.mxu0 %v45
    %221 = vmatprep.mubr.f32.mxu0 %v76
    %222 = vmatmul.mubr.f32.gmra.mxu0 %v75
    %v223 = vpop.f32.mrf.mxu0
    %v224 = vadd.f32 %v154, %v223
    %v225 = vpop.f32.mrf.mxu0
    %226 = vdwg.mxu0
    %vm227 = vcmp.ne.s32.totalorder %v27, 255
    %v228 = vsel %vm227, 1, 0
    %v229 = vcvt.s32.f32 %v228
    %v230 = vmax.f32 %v224, 0.0
    %232 = vset.pattern.permute.xlu0 0
    %233 = vperm.xlu0 %232, %v229
    %v234 = vpop.permute.xlu0 %233
    %v236 = vmul.f32 %v230, %v234
    %237 = vst.msk [vmem:[#allocation2] sm:$0xff] %vm83, %v236
    %v238 = vadd.f32 %v236, 0.0
    %239 = vset.pattern.permute.xlu0 1
    %240 = vperm.xlu0 %239, %v27
    %v241 = vpop.permute.xlu0 %240
    %vm242 = vcmp.eq.s32.totalorder %v66, %v241
    %vm243 = vcmp.eq.s32.totalorder %v67, %v241
    %v244 = vsel %vm242, 1, 0
    %v245 = vsel %vm243, 1, 0
    %v246 = vcvt.s32.f32 %v244
    %v247 = vcvt.s32.f32 %v245
    %248 = vset.pattern.permute.xlu0 1
    %249 = vperm.xlu0 %248, %v28
    %v250 = vpop.permute.xlu0 %249
    %vm251 = vcmp.eq.s32.totalorder %v66, %v250
    %v252 = vsel %vm251, 1, 0
    %v253 = vcvt.s32.f32 %v252
    %v255 = vsel %vm83, %v253, 0
    %257 = vmatprep.subr.mxu0 0.0
    %258 = vmatpush1.msra.mxu0 0.0
    %259 = vmatprep.subr.mxu0 0.0
    %260 = vmatpush1.msra.mxu0 0.0
    %261 = vmatprep.subr.mxu0 0.0
    %262 = vmatpush1.msra.mxu0 0.0
    %263 = vmatprep.subr.mxu0 0.0
    %264 = vmatpush1.msra.mxu0 0.0
    %265 = vmatprep.subr.mxu0 0.0
    %266 = vmatpush1.msra.mxu0 0.0
    %267 = vmatprep.subr.mxu0 0.0
    %268 = vmatpush1.msra.mxu0 0.0
    %269 = vmatprep.subr.mxu0 0.0
    %270 = vmatpush1.msra.mxu0 0.0
    %271 = vmatprep.subr.mxu0 0.0
    %272 = vmatpush1.msra.mxu0 0.0
    %273 = vmatprep.subr.mxu0 0.0
    %274 = vmatpush1.msra.mxu0 0.0
    %275 = vmatprep.subr.mxu0 0.0
    %276 = vmatpush1.msra.mxu0 0.0
    %277 = vmatprep.subr.mxu0 0.0
    %278 = vmatpush1.msra.mxu0 0.0
    %279 = vmatprep.subr.mxu0 0.0
    %280 = vmatpush1.msra.mxu0 0.0
    %281 = vmatprep.subr.mxu0 0.0
    %282 = vmatpush1.msra.mxu0 %v64
    %283 = vmatprep.subr.mxu0 0.0
    %284 = vmatpush1.msra.mxu0 %v63
    %285 = vmatprep.subr.mxu0 0.0
    %286 = vmatpush1.msra.mxu0 %v62
    %287 = vmatprep.subr.mxu0 0.0
    %288 = vmatpush1.msra.mxu0 %v61
    %289 = vmatprep.subr.mxu0 0.0
    %290 = vmatpush2.msra.mxu0 0.0
    %291 = vmatprep.subr.mxu0 0.0
    %292 = vmatpush2.msra.mxu0 0.0
    %293 = vmatprep.subr.mxu0 0.0
    %294 = vmatpush2.msra.mxu0 0.0
    %295 = vmatprep.subr.mxu0 0.0
    %296 = vmatpush2.msra.mxu0 0.0
    %297 = vmatprep.subr.mxu0 0.0
    %298 = vmatpush2.msra.mxu0 0.0
    %299 = vmatprep.subr.mxu0 0.0
    %300 = vmatpush2.msra.mxu0 0.0
    %301 = vmatprep.subr.mxu0 0.0
    %302 = vmatpush2.msra.mxu0 0.0
    %303 = vmatprep.subr.mxu0 0.0
    %304 = vmatpush2.msra.mxu0 0.0
    %305 = vmatprep.subr.mxu0 0.0
    %306 = vmatpush2.msra.mxu0 0.0
    %307 = vmatprep.subr.mxu0 0.0
    %308 = vmatpush2.msra.mxu0 0.0
    %309 = vmatprep.subr.mxu0 0.0
    %310 = vmatpush2.msra.mxu0 0.0
    %311 = vmatprep.subr.mxu0 0.0
    %312 = vmatpush2.msra.mxu0 0.0
    %313 = vmatprep.subr.mxu0 0.0
    %314 = vmatpush2.msra.mxu0 0.0
    %315 = vmatprep.subr.mxu0 0.0
    %316 = vmatpush2.msra.mxu0 0.0
    %317 = vmatprep.subr.mxu0 0.0
    %318 = vmatpush2.msra.mxu0 0.0
    %319 = vmatprep.subr.mxu0 0.0
    %320 = vmatpush2.msra.mxu0 0.0
    %321 = vmatprep.mubr.f32.mxu0 0.0
    %322 = vmatmul.mubr.f32.gmra.mxu0 %v255
    %v323 = vpop.f32.mrf.mxu0
    %v324 = vadd.f32 0.0, %v323
    %v325 = vpop.f32.mrf.mxu0
    %326 = vdwg.mxu0
    %327 = vmatprep.subr.mxu0 0.0
    %328 = vmatpush1.msra.mxu0 %v44
    %329 = vmatprep.subr.mxu0 0.0
    %330 = vmatpush1.msra.mxu0 %v43
    %331 = vmatprep.subr.mxu0 0.0
    %332 = vmatpush1.msra.mxu0 %v42
    %333 = vmatprep.subr.mxu0 0.0
    %334 = vmatpush1.msra.mxu0 %v41
    %335 = vmatprep.subr.mxu0 0.0
    %336 = vmatpush1.msra.mxu0 %v40
    %337 = vmatprep.subr.mxu0 0.0
    %338 = vmatpush1.msra.mxu0 %v39
    %339 = vmatprep.subr.mxu0 0.0
    %340 = vmatpush1.msra.mxu0 %v38
    %341 = vmatprep.subr.mxu0 0.0
    %342 = vmatpush1.msra.mxu0 %v37
    %343 = vmatprep.subr.mxu0 0.0
    %344 = vmatpush1.msra.mxu0 %v36
    %345 = vmatprep.subr.mxu0 0.0
    %346 = vmatpush1.msra.mxu0 %v35
    %347 = vmatprep.subr.mxu0 0.0
    %348 = vmatpush1.msra.mxu0 %v34
    %349 = vmatprep.subr.mxu0 0.0
    %350 = vmatpush1.msra.mxu0 %v33
    %351 = vmatprep.subr.mxu0 0.0
    %352 = vmatpush1.msra.mxu0 %v32
    %353 = vmatprep.subr.mxu0 0.0
    %354 = vmatpush1.msra.mxu0 %v31
    %355 = vmatprep.subr.mxu0 0.0
    %356 = vmatpush1.msra.mxu0 %v30
    %357 = vmatprep.subr.mxu0 0.0
    %358 = vmatpush1.msra.mxu0 %v29
    %359 = vmatprep.subr.mxu0 0.0
    %360 = vmatpush2.msra.mxu0 %v60
    %361 = vmatprep.subr.mxu0 0.0
    %362 = vmatpush2.msra.mxu0 %v59
    %363 = vmatprep.subr.mxu0 0.0
    %364 = vmatpush2.msra.mxu0 %v58
    %365 = vmatprep.subr.mxu0 0.0
    %366 = vmatpush2.msra.mxu0 %v57
    %367 = vmatprep.subr.mxu0 0.0
    %368 = vmatpush2.msra.mxu0 %v56
    %369 = vmatprep.subr.mxu0 0.0
    %370 = vmatpush2.msra.mxu0 %v55
    %371 = vmatprep.subr.mxu0 0.0
    %372 = vmatpush2.msra.mxu0 %v54
    %373 = vmatprep.subr.mxu0 0.0
    %374 = vmatpush2.msra.mxu0 %v53
    %375 = vmatprep.subr.mxu0 0.0
    %376 = vmatpush2.msra.mxu0 %v52
    %377 = vmatprep.subr.mxu0 0.0
    %378 = vmatpush2.msra.mxu0 %v51
    %379 = vmatprep.subr.mxu0 0.0
    %380 = vmatpush2.msra.mxu0 %v50
    %381 = vmatprep.subr.mxu0 0.0
    %382 = vmatpush2.msra.mxu0 %v49
    %383 = vmatprep.subr.mxu0 0.0
    %384 = vmatpush2.msra.mxu0 %v48
    %385 = vmatprep.subr.mxu0 0.0
    %386 = vmatpush2.msra.mxu0 %v47
    %387 = vmatprep.subr.mxu0 0.0
    %388 = vmatpush2.msra.mxu0 %v46
    %389 = vmatprep.subr.mxu0 0.0
    %390 = vmatpush2.msra.mxu0 %v45
    %391 = vmatprep.mubr.f32.mxu0 %v247
    %392 = vmatmul.mubr.f32.gmra.mxu0 %v246
    %v393 = vpop.f32.mrf.mxu0
    %v394 = vadd.f32 %v324, %v393
    %v395 = vpop.f32.mrf.mxu0
    %396 = vdwg.mxu0
    %v397 = vmax.f32 %v394, 0.0
    %398 = vset.pattern.permute.xlu0 1
    %399 = vperm.xlu0 %398, %v229
    %v400 = vpop.permute.xlu0 %399
    %v402 = vmul.f32 %v397, %v400
    %404 = vrot.lane.b32.xlu0 %v402, 32
    %v405 = vpop.permute.xlu0 %404
    %vm407 = vcmask 523520
    %408 = vst.msk [vmem:[#allocation2] sm:$0xff] %vm407, %v405
    %v409 = vadd.f32 %v238, %v402
    %410 = vset.pattern.permute.xlu0 2
    %411 = vperm.xlu0 %410, %v27
    %v412 = vpop.permute.xlu0 %411
    %vm413 = vcmp.eq.s32.totalorder %v66, %v412
    %vm414 = vcmp.eq.s32.totalorder %v67, %v412
    %v415 = vsel %vm413, 1, 0
    %v416 = vsel %vm414, 1, 0
    %v417 = vcvt.s32.f32 %v415
    %v418 = vcvt.s32.f32 %v416
    %419 = vset.pattern.permute.xlu0 2
    %420 = vperm.xlu0 %419, %v28
    %v421 = vpop.permute.xlu0 %420
    %vm422 = vcmp.eq.s32.totalorder %v66, %v421
    %v423 = vsel %vm422, 1, 0
    %v424 = vcvt.s32.f32 %v423
    %v426 = vsel %vm83, %v424, 0
    %428 = vmatprep.subr.mxu0 0.0
    %429 = vmatpush1.msra.mxu0 0.0
    %430 = vmatprep.subr.mxu0 0.0
    %431 = vmatpush1.msra.mxu0 0.0
    %432 = vmatprep.subr.mxu0 0.0
    %433 = vmatpush1.msra.mxu0 0.0
    %434 = vmatprep.subr.mxu0 0.0
    %435 = vmatpush1.msra.mxu0 0.0
    %436 = vmatprep.subr.mxu0 0.0
    %437 = vmatpush1.msra.mxu0 0.0
    %438 = vmatprep.subr.mxu0 0.0
    %439 = vmatpush1.msra.mxu0 0.0
    %440 = vmatprep.subr.mxu0 0.0
    %441 = vmatpush1.msra.mxu0 0.0
    %442 = vmatprep.subr.mxu0 0.0
    %443 = vmatpush1.msra.mxu0 0.0
    %444 = vmatprep.subr.mxu0 0.0
    %445 = vmatpush1.msra.mxu0 0.0
    %446 = vmatprep.subr.mxu0 0.0
    %447 = vmatpush1.msra.mxu0 0.0
    %448 = vmatprep.subr.mxu0 0.0
    %449 = vmatpush1.msra.mxu0 0.0
    %450 = vmatprep.subr.mxu0 0.0
    %451 = vmatpush1.msra.mxu0 0.0
    %452 = vmatprep.subr.mxu0 0.0
    %453 = vmatpush1.msra.mxu0 %v64
    %454 = vmatprep.subr.mxu0 0.0
    %455 = vmatpush1.msra.mxu0 %v63
    %456 = vmatprep.subr.mxu0 0.0
    %457 = vmatpush1.msra.mxu0 %v62
    %458 = vmatprep.subr.mxu0 0.0
    %459 = vmatpush1.msra.mxu0 %v61
    %460 = vmatprep.subr.mxu0 0.0
    %461 = vmatpush2.msra.mxu0 0.0
    %462 = vmatprep.subr.mxu0 0.0
    %463 = vmatpush2.msra.mxu0 0.0
    %464 = vmatprep.subr.mxu0 0.0
    %465 = vmatpush2.msra.mxu0 0.0
    %466 = vmatprep.subr.mxu0 0.0
    %467 = vmatpush2.msra.mxu0 0.0
    %468 = vmatprep.subr.mxu0 0.0
    %469 = vmatpush2.msra.mxu0 0.0
    %470 = vmatprep.subr.mxu0 0.0
    %471 = vmatpush2.msra.mxu0 0.0
    %472 = vmatprep.subr.mxu0 0.0
    %473 = vmatpush2.msra.mxu0 0.0
    %474 = vmatprep.subr.mxu0 0.0
    %475 = vmatpush2.msra.mxu0 0.0
    %476 = vmatprep.subr.mxu0 0.0
    %477 = vmatpush2.msra.mxu0 0.0
    %478 = vmatprep.subr.mxu0 0.0
    %479 = vmatpush2.msra.mxu0 0.0
    %480 = vmatprep.subr.mxu0 0.0
    %481 = vmatpush2.msra.mxu0 0.0
    %482 = vmatprep.subr.mxu0 0.0
    %483 = vmatpush2.msra.mxu0 0.0
    %484 = vmatprep.subr.mxu0 0.0
    %485 = vmatpush2.msra.mxu0 0.0
    %486 = vmatprep.subr.mxu0 0.0
    %487 = vmatpush2.msra.mxu0 0.0
    %488 = vmatprep.subr.mxu0 0.0
    %489 = vmatpush2.msra.mxu0 0.0
    %490 = vmatprep.subr.mxu0 0.0
    %491 = vmatpush2.msra.mxu0 0.0
    %492 = vmatprep.mubr.f32.mxu0 0.0
    %493 = vmatmul.mubr.f32.gmra.mxu0 %v426
    %v494 = vpop.f32.mrf.mxu0
    %v495 = vadd.f32 0.0, %v494
    %v496 = vpop.f32.mrf.mxu0
    %497 = vdwg.mxu0
    %498 = vmatprep.subr.mxu0 0.0
    %499 = vmatpush1.msra.mxu0 %v44
    %500 = vmatprep.subr.mxu0 0.0
    %501 = vmatpush1.msra.mxu0 %v43
    %502 = vmatprep.subr.mxu0 0.0
    %503 = vmatpush1.msra.mxu0 %v42
    %504 = vmatprep.subr.mxu0 0.0
    %505 = vmatpush1.msra.mxu0 %v41
    %506 = vmatprep.subr.mxu0 0.0
    %507 = vmatpush1.msra.mxu0 %v40
    %508 = vmatprep.subr.mxu0 0.0
    %509 = vmatpush1.msra.mxu0 %v39
    %510 = vmatprep.subr.mxu0 0.0
    %511 = vmatpush1.msra.mxu0 %v38
    %512 = vmatprep.subr.mxu0 0.0
    %513 = vmatpush1.msra.mxu0 %v37
    %514 = vmatprep.subr.mxu0 0.0
    %515 = vmatpush1.msra.mxu0 %v36
    %516 = vmatprep.subr.mxu0 0.0
    %517 = vmatpush1.msra.mxu0 %v35
    %518 = vmatprep.subr.mxu0 0.0
    %519 = vmatpush1.msra.mxu0 %v34
    %520 = vmatprep.subr.mxu0 0.0
    %521 = vmatpush1.msra.mxu0 %v33
    %522 = vmatprep.subr.mxu0 0.0
    %523 = vmatpush1.msra.mxu0 %v32
    %524 = vmatprep.subr.mxu0 0.0
    %525 = vmatpush1.msra.mxu0 %v31
    %526 = vmatprep.subr.mxu0 0.0
    %527 = vmatpush1.msra.mxu0 %v30
    %528 = vmatprep.subr.mxu0 0.0
    %529 = vmatpush1.msra.mxu0 %v29
    %530 = vmatprep.subr.mxu0 0.0
    %531 = vmatpush2.msra.mxu0 %v60
    %532 = vmatprep.subr.mxu0 0.0
    %533 = vmatpush2.msra.mxu0 %v59
    %534 = vmatprep.subr.mxu0 0.0
    %535 = vmatpush2.msra.mxu0 %v58
    %536 = vmatprep.subr.mxu0 0.0
    %537 = vmatpush2.msra.mxu0 %v57
    %538 = vmatprep.subr.mxu0 0.0
    %539 = vmatpush2.msra.mxu0 %v56
    %540 = vmatprep.subr.mxu0 0.0
    %541 = vmatpush2.msra.mxu0 %v55
    %542 = vmatprep.subr.mxu0 0.0
    %543 = vmatpush2.msra.mxu0 %v54
    %544 = vmatprep.subr.mxu0 0.0
    %545 = vmatpush2.msra.mxu0 %v53
    %546 = vmatprep.subr.mxu0 0.0
    %547 = vmatpush2.msra.mxu0 %v52
    %548 = vmatprep.subr.mxu0 0.0
    %549 = vmatpush2.msra.mxu0 %v51
    %550 = vmatprep.subr.mxu0 0.0
    %551 = vmatpush2.msra.mxu0 %v50
    %552 = vmatprep.subr.mxu0 0.0
    %553 = vmatpush2.msra.mxu0 %v49
    %554 = vmatprep.subr.mxu0 0.0
    %555 = vmatpush2.msra.mxu0 %v48
    %556 = vmatprep.subr.mxu0 0.0
    %557 = vmatpush2.msra.mxu0 %v47
    %558 = vmatprep.subr.mxu0 0.0
    %559 = vmatpush2.msra.mxu0 %v46
    %560 = vmatprep.subr.mxu0 0.0
    %561 = vmatpush2.msra.mxu0 %v45
    %562 = vmatprep.mubr.f32.mxu0 %v418
    %563 = vmatmul.mubr.f32.gmra.mxu0 %v417
    %v564 = vpop.f32.mrf.mxu0
    %v565 = vadd.f32 %v495, %v564
    %v566 = vpop.f32.mrf.mxu0
    %567 = vdwg.mxu0
    %v568 = vmax.f32 %v565, 0.0
    %569 = vset.pattern.permute.xlu0 2
    %570 = vperm.xlu0 %569, %v229
    %v571 = vpop.permute.xlu0 %570
    %v573 = vmul.f32 %v568, %v571
    %575 = vrot.lane.b32.xlu0 %v573, 64
    %v576 = vpop.permute.xlu0 %575
    %vm578 = vcmask 785920
    %579 = vst.msk [vmem:[#allocation2] sm:$0xff] %vm578, %v576
    %v580 = vadd.f32 %v409, %v573
    %581 = vset.pattern.permute.xlu0 3
    %582 = vperm.xlu0 %581, %v27
    %v583 = vpop.permute.xlu0 %582
    %vm584 = vcmp.eq.s32.totalorder %v66, %v583
    %vm585 = vcmp.eq.s32.totalorder %v67, %v583
    %v586 = vsel %vm584, 1, 0
    %v587 = vsel %vm585, 1, 0
    %v588 = vcvt.s32.f32 %v586
    %v589 = vcvt.s32.f32 %v587
    %590 = vset.pattern.permute.xlu0 3
    %591 = vperm.xlu0 %590, %v28
    %v592 = vpop.permute.xlu0 %591
    %vm593 = vcmp.eq.s32.totalorder %v66, %v592
    %v594 = vsel %vm593, 1, 0
    %v595 = vcvt.s32.f32 %v594
    %v597 = vsel %vm83, %v595, 0
    %599 = vmatprep.subr.mxu0 0.0
    %600 = vmatpush1.msra.mxu0 0.0
    %601 = vmatprep.subr.mxu0 0.0
    %602 = vmatpush1.msra.mxu0 0.0
    %603 = vmatprep.subr.mxu0 0.0
    %604 = vmatpush1.msra.mxu0 0.0
    %605 = vmatprep.subr.mxu0 0.0
    %606 = vmatpush1.msra.mxu0 0.0
    %607 = vmatprep.subr.mxu0 0.0
    %608 = vmatpush1.msra.mxu0 0.0
    %609 = vmatprep.subr.mxu0 0.0
    %610 = vmatpush1.msra.mxu0 0.0
    %611 = vmatprep.subr.mxu0 0.0
    %612 = vmatpush1.msra.mxu0 0.0
    %613 = vmatprep.subr.mxu0 0.0
    %614 = vmatpush1.msra.mxu0 0.0
    %615 = vmatprep.subr.mxu0 0.0
    %616 = vmatpush1.msra.mxu0 0.0
    %617 = vmatprep.subr.mxu0 0.0
    %618 = vmatpush1.msra.mxu0 0.0
    %619 = vmatprep.subr.mxu0 0.0
    %620 = vmatpush1.msra.mxu0 0.0
    %621 = vmatprep.subr.mxu0 0.0
    %622 = vmatpush1.msra.mxu0 0.0
    %623 = vmatprep.subr.mxu0 0.0
    %624 = vmatpush1.msra.mxu0 %v64
    %625 = vmatprep.subr.mxu0 0.0
    %626 = vmatpush1.msra.mxu0 %v63
    %627 = vmatprep.subr.mxu0 0.0
    %628 = vmatpush1.msra.mxu0 %v62
    %629 = vmatprep.subr.mxu0 0.0
    %630 = vmatpush1.msra.mxu0 %v61
    %631 = vmatprep.subr.mxu0 0.0
    %632 = vmatpush2.msra.mxu0 0.0
    %633 = vmatprep.subr.mxu0 0.0
    %634 = vmatpush2.msra.mxu0 0.0
    %635 = vmatprep.subr.mxu0 0.0
    %636 = vmatpush2.msra.mxu0 0.0
    %637 = vmatprep.subr.mxu0 0.0
    %638 = vmatpush2.msra.mxu0 0.0
    %639 = vmatprep.subr.mxu0 0.0
    %640 = vmatpush2.msra.mxu0 0.0
    %641 = vmatprep.subr.mxu0 0.0
    %642 = vmatpush2.msra.mxu0 0.0
    %643 = vmatprep.subr.mxu0 0.0
    %644 = vmatpush2.msra.mxu0 0.0
    %645 = vmatprep.subr.mxu0 0.0
    %646 = vmatpush2.msra.mxu0 0.0
    %647 = vmatprep.subr.mxu0 0.0
    %648 = vmatpush2.msra.mxu0 0.0
    %649 = vmatprep.subr.mxu0 0.0
    %650 = vmatpush2.msra.mxu0 0.0
    %651 = vmatprep.subr.mxu0 0.0
    %652 = vmatpush2.msra.mxu0 0.0
    %653 = vmatprep.subr.mxu0 0.0
    %654 = vmatpush2.msra.mxu0 0.0
    %655 = vmatprep.subr.mxu0 0.0
    %656 = vmatpush2.msra.mxu0 0.0
    %657 = vmatprep.subr.mxu0 0.0
    %658 = vmatpush2.msra.mxu0 0.0
    %659 = vmatprep.subr.mxu0 0.0
    %660 = vmatpush2.msra.mxu0 0.0
    %661 = vmatprep.subr.mxu0 0.0
    %662 = vmatpush2.msra.mxu0 0.0
    %663 = vmatprep.mubr.f32.mxu0 0.0
    %664 = vmatmul.mubr.f32.gmra.mxu0 %v597
    %v665 = vpop.f32.mrf.mxu0
    %v666 = vadd.f32 0.0, %v665
    %v667 = vpop.f32.mrf.mxu0
    %668 = vdwg.mxu0
    %669 = vmatprep.subr.mxu0 0.0
    %670 = vmatpush1.msra.mxu0 %v44
    %671 = vmatprep.subr.mxu0 0.0
    %672 = vmatpush1.msra.mxu0 %v43
    %673 = vmatprep.subr.mxu0 0.0
    %674 = vmatpush1.msra.mxu0 %v42
    %675 = vmatprep.subr.mxu0 0.0
    %676 = vmatpush1.msra.mxu0 %v41
    %677 = vmatprep.subr.mxu0 0.0
    %678 = vmatpush1.msra.mxu0 %v40
    %679 = vmatprep.subr.mxu0 0.0
    %680 = vmatpush1.msra.mxu0 %v39
    %681 = vmatprep.subr.mxu0 0.0
    %682 = vmatpush1.msra.mxu0 %v38
    %683 = vmatprep.subr.mxu0 0.0
    %684 = vmatpush1.msra.mxu0 %v37
    %685 = vmatprep.subr.mxu0 0.0
    %686 = vmatpush1.msra.mxu0 %v36
    %687 = vmatprep.subr.mxu0 0.0
    %688 = vmatpush1.msra.mxu0 %v35
    %689 = vmatprep.subr.mxu0 0.0
    %690 = vmatpush1.msra.mxu0 %v34
    %691 = vmatprep.subr.mxu0 0.0
    %692 = vmatpush1.msra.mxu0 %v33
    %693 = vmatprep.subr.mxu0 0.0
    %694 = vmatpush1.msra.mxu0 %v32
    %695 = vmatprep.subr.mxu0 0.0
    %696 = vmatpush1.msra.mxu0 %v31
    %697 = vmatprep.subr.mxu0 0.0
    %698 = vmatpush1.msra.mxu0 %v30
    %699 = vmatprep.subr.mxu0 0.0
    %700 = vmatpush1.msra.mxu0 %v29
    %701 = vmatprep.subr.mxu0 0.0
    %702 = vmatpush2.msra.mxu0 %v60
    %703 = vmatprep.subr.mxu0 0.0
    %704 = vmatpush2.msra.mxu0 %v59
    %705 = vmatprep.subr.mxu0 0.0
    %706 = vmatpush2.msra.mxu0 %v58
    %707 = vmatprep.subr.mxu0 0.0
    %708 = vmatpush2.msra.mxu0 %v57
    %709 = vmatprep.subr.mxu0 0.0
    %710 = vmatpush2.msra.mxu0 %v56
    %711 = vmatprep.subr.mxu0 0.0
    %712 = vmatpush2.msra.mxu0 %v55
    %713 = vmatprep.subr.mxu0 0.0
    %714 = vmatpush2.msra.mxu0 %v54
    %715 = vmatprep.subr.mxu0 0.0
    %716 = vmatpush2.msra.mxu0 %v53
    %717 = vmatprep.subr.mxu0 0.0
    %718 = vmatpush2.msra.mxu0 %v52
    %719 = vmatprep.subr.mxu0 0.0
    %720 = vmatpush2.msra.mxu0 %v51
    %721 = vmatprep.subr.mxu0 0.0
    %722 = vmatpush2.msra.mxu0 %v50
    %723 = vmatprep.subr.mxu0 0.0
    %724 = vmatpush2.msra.mxu0 %v49
    %725 = vmatprep.subr.mxu0 0.0
    %726 = vmatpush2.msra.mxu0 %v48
    %727 = vmatprep.subr.mxu0 0.0
    %728 = vmatpush2.msra.mxu0 %v47
    %729 = vmatprep.subr.mxu0 0.0
    %730 = vmatpush2.msra.mxu0 %v46
    %731 = vmatprep.subr.mxu0 0.0
    %732 = vmatpush2.msra.mxu0 %v45
    %733 = vmatprep.mubr.f32.mxu0 %v589
    %734 = vmatmul.mubr.f32.gmra.mxu0 %v588
    %v735 = vpop.f32.mrf.mxu0
    %v736 = vadd.f32 %v666, %v735
    %v737 = vpop.f32.mrf.mxu0
    %738 = vdwg.mxu0
    %v739 = vmax.f32 %v736, 0.0
    %740 = vset.pattern.permute.xlu0 3
    %741 = vperm.xlu0 %740, %v229
    %v742 = vpop.permute.xlu0 %741
    %v744 = vmul.f32 %v739, %v742
    %746 = vrot.lane.b32.xlu0 %v744, 96
    %v747 = vpop.permute.xlu0 %746
    %vm749 = vcmask 1048320
    %750 = vst.msk [vmem:[#allocation2] sm:$0xff] %vm749, %v747
    %v751 = vadd.f32 %v580, %v744
    %752 = vset.pattern.permute.xlu0 4
    %753 = vperm.xlu0 %752, %v27
    %v754 = vpop.permute.xlu0 %753
    %vm755 = vcmp.eq.s32.totalorder %v66, %v754
    %vm756 = vcmp.eq.s32.totalorder %v67, %v754
    %v757 = vsel %vm755, 1, 0
    %v758 = vsel %vm756, 1, 0
    %v759 = vcvt.s32.f32 %v757
    %v760 = vcvt.s32.f32 %v758
    %761 = vset.pattern.permute.xlu0 4
    %762 = vperm.xlu0 %761, %v28
    %v763 = vpop.permute.xlu0 %762
    %vm764 = vcmp.eq.s32.totalorder %v66, %v763
    %v765 = vsel %vm764, 1, 0
    %v766 = vcvt.s32.f32 %v765
    %v768 = vsel %vm83, %v766, 0
    %770 = vmatprep.subr.mxu0 0.0
    %771 = vmatpush1.msra.mxu0 0.0
    %772 = vmatprep.subr.mxu0 0.0
    %773 = vmatpush1.msra.mxu0 0.0
    %774 = vmatprep.subr.mxu0 0.0
    %775 = vmatpush1.msra.mxu0 0.0
    %776 = vmatprep.subr.mxu0 0.0
    %777 = vmatpush1.msra.mxu0 0.0
    %778 = vmatprep.subr.mxu0 0.0
    %779 = vmatpush1.msra.mxu0 0.0
    %780 = vmatprep.subr.mxu0 0.0
    %781 = vmatpush1.msra.mxu0 0.0
    %782 = vmatprep.subr.mxu0 0.0
    %783 = vmatpush1.msra.mxu0 0.0
    %784 = vmatprep.subr.mxu0 0.0
    %785 = vmatpush1.msra.mxu0 0.0
    %786 = vmatprep.subr.mxu0 0.0
    %787 = vmatpush1.msra.mxu0 0.0
    %788 = vmatprep.subr.mxu0 0.0
    %789 = vmatpush1.msra.mxu0 0.0
    %790 = vmatprep.subr.mxu0 0.0
    %791 = vmatpush1.msra.mxu0 0.0
    %792 = vmatprep.subr.mxu0 0.0
    %793 = vmatpush1.msra.mxu0 0.0
    %794 = vmatprep.subr.mxu0 0.0
    %795 = vmatpush1.msra.mxu0 %v64
    %796 = vmatprep.subr.mxu0 0.0
    %797 = vmatpush1.msra.mxu0 %v63
    %798 = vmatprep.subr.mxu0 0.0
    %799 = vmatpush1.msra.mxu0 %v62
    %800 = vmatprep.subr.mxu0 0.0
    %801 = vmatpush1.msra.mxu0 %v61
    %802 = vmatprep.subr.mxu0 0.0
    %803 = vmatpush2.msra.mxu0 0.0
    %804 = vmatprep.subr.mxu0 0.0
    %805 = vmatpush2.msra.mxu0 0.0
    %806 = vmatprep.subr.mxu0 0.0
    %807 = vmatpush2.msra.mxu0 0.0
    %808 = vmatprep.subr.mxu0 0.0
    %809 = vmatpush2.msra.mxu0 0.0
    %810 = vmatprep.subr.mxu0 0.0
    %811 = vmatpush2.msra.mxu0 0.0
    %812 = vmatprep.subr.mxu0 0.0
    %813 = vmatpush2.msra.mxu0 0.0
    %814 = vmatprep.subr.mxu0 0.0
    %815 = vmatpush2.msra.mxu0 0.0
    %816 = vmatprep.subr.mxu0 0.0
    %817 = vmatpush2.msra.mxu0 0.0
    %818 = vmatprep.subr.mxu0 0.0
    %819 = vmatpush2.msra.mxu0 0.0
    %820 = vmatprep.subr.mxu0 0.0
    %821 = vmatpush2.msra.mxu0 0.0
    %822 = vmatprep.subr.mxu0 0.0
    %823 = vmatpush2.msra.mxu0 0.0
    %824 = vmatprep.subr.mxu0 0.0
    %825 = vmatpush2.msra.mxu0 0.0
    %826 = vmatprep.subr.mxu0 0.0
    %827 = vmatpush2.msra.mxu0 0.0
    %828 = vmatprep.subr.mxu0 0.0
    %829 = vmatpush2.msra.mxu0 0.0
    %830 = vmatprep.subr.mxu0 0.0
    %831 = vmatpush2.msra.mxu0 0.0
    %832 = vmatprep.subr.mxu0 0.0
    %833 = vmatpush2.msra.mxu0 0.0
    %834 = vmatprep.mubr.f32.mxu0 0.0
    %835 = vmatmul.mubr.f32.gmra.mxu0 %v768
    %v836 = vpop.f32.mrf.mxu0
    %v837 = vadd.f32 0.0, %v836
    %v838 = vpop.f32.mrf.mxu0
    %839 = vdwg.mxu0
    %840 = vmatprep.subr.mxu0 0.0
    %841 = vmatpush1.msra.mxu0 %v44
    %842 = vmatprep.subr.mxu0 0.0
    %843 = vmatpush1.msra.mxu0 %v43
    %844 = vmatprep.subr.mxu0 0.0
    %845 = vmatpush1.msra.mxu0 %v42
    %846 = vmatprep.subr.mxu0 0.0
    %847 = vmatpush1.msra.mxu0 %v41
    %848 = vmatprep.subr.mxu0 0.0
    %849 = vmatpush1.msra.mxu0 %v40
    %850 = vmatprep.subr.mxu0 0.0
    %851 = vmatpush1.msra.mxu0 %v39
    %852 = vmatprep.subr.mxu0 0.0
    %853 = vmatpush1.msra.mxu0 %v38
    %854 = vmatprep.subr.mxu0 0.0
    %855 = vmatpush1.msra.mxu0 %v37
    %856 = vmatprep.subr.mxu0 0.0
    %857 = vmatpush1.msra.mxu0 %v36
    %858 = vmatprep.subr.mxu0 0.0
    %859 = vmatpush1.msra.mxu0 %v35
    %860 = vmatprep.subr.mxu0 0.0
    %861 = vmatpush1.msra.mxu0 %v34
    %862 = vmatprep.subr.mxu0 0.0
    %863 = vmatpush1.msra.mxu0 %v33
    %864 = vmatprep.subr.mxu0 0.0
    %865 = vmatpush1.msra.mxu0 %v32
    %866 = vmatprep.subr.mxu0 0.0
    %867 = vmatpush1.msra.mxu0 %v31
    %868 = vmatprep.subr.mxu0 0.0
    %869 = vmatpush1.msra.mxu0 %v30
    %870 = vmatprep.subr.mxu0 0.0
    %871 = vmatpush1.msra.mxu0 %v29
    %872 = vmatprep.subr.mxu0 0.0
    %873 = vmatpush2.msra.mxu0 %v60
    %874 = vmatprep.subr.mxu0 0.0
    %875 = vmatpush2.msra.mxu0 %v59
    %876 = vmatprep.subr.mxu0 0.0
    %877 = vmatpush2.msra.mxu0 %v58
    %878 = vmatprep.subr.mxu0 0.0
    %879 = vmatpush2.msra.mxu0 %v57
    %880 = vmatprep.subr.mxu0 0.0
    %881 = vmatpush2.msra.mxu0 %v56
    %882 = vmatprep.subr.mxu0 0.0
    %883 = vmatpush2.msra.mxu0 %v55
    %884 = vmatprep.subr.mxu0 0.0
    %885 = vmatpush2.msra.mxu0 %v54
    %886 = vmatprep.subr.mxu0 0.0
    %887 = vmatpush2.msra.mxu0 %v53
    %888 = vmatprep.subr.mxu0 0.0
    %889 = vmatpush2.msra.mxu0 %v52
    %890 = vmatprep.subr.mxu0 0.0
    %891 = vmatpush2.msra.mxu0 %v51
    %892 = vmatprep.subr.mxu0 0.0
    %893 = vmatpush2.msra.mxu0 %v50
    %894 = vmatprep.subr.mxu0 0.0
    %895 = vmatpush2.msra.mxu0 %v49
    %896 = vmatprep.subr.mxu0 0.0
    %897 = vmatpush2.msra.mxu0 %v48
    %898 = vmatprep.subr.mxu0 0.0
    %899 = vmatpush2.msra.mxu0 %v47
    %900 = vmatprep.subr.mxu0 0.0
    %901 = vmatpush2.msra.mxu0 %v46
    %902 = vmatprep.subr.mxu0 0.0
    %903 = vmatpush2.msra.mxu0 %v45
    %904 = vmatprep.mubr.f32.mxu0 %v760
    %905 = vmatmul.mubr.f32.gmra.mxu0 %v759
    %v906 = vpop.f32.mrf.mxu0
    %v907 = vadd.f32 %v837, %v906
    %v908 = vpop.f32.mrf.mxu0
    %909 = vdwg.mxu0
    %v910 = vmax.f32 %v907, 0.0
    %911 = vset.pattern.permute.xlu0 4
    %912 = vperm.xlu0 %911, %v229
    %v913 = vpop.permute.xlu0 %912
    %v915 = vmul.f32 %v910, %v913
    %916 = vst.msk [vmem:[#allocation2 + $0x8] sm:$0xff] %vm83, %v915
    %v917 = vadd.f32 %v751, %v915
    %918 = vset.pattern.permute.xlu0 5
    %919 = vperm.xlu0 %918, %v27
    %v920 = vpop.permute.xlu0 %919
    %vm921 = vcmp.eq.s32.totalorder %v66, %v920
    %vm922 = vcmp.eq.s32.totalorder %v67, %v920
    %v923 = vsel %vm921, 1, 0
    %v924 = vsel %vm922, 1, 0
    %v925 = vcvt.s32.f32 %v923
    %v926 = vcvt.s32.f32 %v924
    %927 = vset.pattern.permute.xlu0 5
    %928 = vperm.xlu0 %927, %v28
    %v929 = vpop.permute.xlu0 %928
    %vm930 = vcmp.eq.s32.totalorder %v66, %v929
    %v931 = vsel %vm930, 1, 0
    %v932 = vcvt.s32.f32 %v931
    %v934 = vsel %vm83, %v932, 0
    %936 = vmatprep.subr.mxu0 0.0
    %937 = vmatpush1.msra.mxu0 0.0
    %938 = vmatprep.subr.mxu0 0.0
    %939 = vmatpush1.msra.mxu0 0.0
    %940 = vmatprep.subr.mxu0 0.0
    %941 = vmatpush1.msra.mxu0 0.0
    %942 = vmatprep.subr.mxu0 0.0
    %943 = vmatpush1.msra.mxu0 0.0
    %944 = vmatprep.subr.mxu0 0.0
    %945 = vmatpush1.msra.mxu0 0.0
    %946 = vmatprep.subr.mxu0 0.0
    %947 = vmatpush1.msra.mxu0 0.0
    %948 = vmatprep.subr.mxu0 0.0
    %949 = vmatpush1.msra.mxu0 0.0
    %950 = vmatprep.subr.mxu0 0.0
    %951 = vmatpush1.msra.mxu0 0.0
    %952 = vmatprep.subr.mxu0 0.0
    %953 = vmatpush1.msra.mxu0 0.0
    %954 = vmatprep.subr.mxu0 0.0
    %955 = vmatpush1.msra.mxu0 0.0
    %956 = vmatprep.subr.mxu0 0.0
    %957 = vmatpush1.msra.mxu0 0.0
    %958 = vmatprep.subr.mxu0 0.0
    %959 = vmatpush1.msra.mxu0 0.0
    %960 = vmatprep.subr.mxu0 0.0
    %961 = vmatpush1.msra.mxu0 %v64
    %962 = vmatprep.subr.mxu0 0.0
    %963 = vmatpush1.msra.mxu0 %v63
    %964 = vmatprep.subr.mxu0 0.0
    %965 = vmatpush1.msra.mxu0 %v62
    %966 = vmatprep.subr.mxu0 0.0
    %967 = vmatpush1.msra.mxu0 %v61
    %968 = vmatprep.subr.mxu0 0.0
    %969 = vmatpush2.msra.mxu0 0.0
    %970 = vmatprep.subr.mxu0 0.0
    %971 = vmatpush2.msra.mxu0 0.0
    %972 = vmatprep.subr.mxu0 0.0
    %973 = vmatpush2.msra.mxu0 0.0
    %974 = vmatprep.subr.mxu0 0.0
    %975 = vmatpush2.msra.mxu0 0.0
    %976 = vmatprep.subr.mxu0 0.0
    %977 = vmatpush2.msra.mxu0 0.0
    %978 = vmatprep.subr.mxu0 0.0
    %979 = vmatpush2.msra.mxu0 0.0
    %980 = vmatprep.subr.mxu0 0.0
    %981 = vmatpush2.msra.mxu0 0.0
    %982 = vmatprep.subr.mxu0 0.0
    %983 = vmatpush2.msra.mxu0 0.0
    %984 = vmatprep.subr.mxu0 0.0
    %985 = vmatpush2.msra.mxu0 0.0
    %986 = vmatprep.subr.mxu0 0.0
    %987 = vmatpush2.msra.mxu0 0.0
    %988 = vmatprep.subr.mxu0 0.0
    %989 = vmatpush2.msra.mxu0 0.0
    %990 = vmatprep.subr.mxu0 0.0
    %991 = vmatpush2.msra.mxu0 0.0
    %992 = vmatprep.subr.mxu0 0.0
    %993 = vmatpush2.msra.mxu0 0.0
    %994 = vmatprep.subr.mxu0 0.0
    %995 = vmatpush2.msra.mxu0 0.0
    %996 = vmatprep.subr.mxu0 0.0
    %997 = vmatpush2.msra.mxu0 0.0
    %998 = vmatprep.subr.mxu0 0.0
    %999 = vmatpush2.msra.mxu0 0.0
    %1000 = vmatprep.mubr.f32.mxu0 0.0
    %1001 = vmatmul.mubr.f32.gmra.mxu0 %v934
    %v1002 = vpop.f32.mrf.mxu0
    %v1003 = vadd.f32 0.0, %v1002
    %v1004 = vpop.f32.mrf.mxu0
    %1005 = vdwg.mxu0
    %1006 = vmatprep.subr.mxu0 0.0
    %1007 = vmatpush1.msra.mxu0 %v44
    %1008 = vmatprep.subr.mxu0 0.0
    %1009 = vmatpush1.msra.mxu0 %v43
    %1010 = vmatprep.subr.mxu0 0.0
    %1011 = vmatpush1.msra.mxu0 %v42
    %1012 = vmatprep.subr.mxu0 0.0
    %1013 = vmatpush1.msra.mxu0 %v41
    %1014 = vmatprep.subr.mxu0 0.0
    %1015 = vmatpush1.msra.mxu0 %v40
    %1016 = vmatprep.subr.mxu0 0.0
    %1017 = vmatpush1.msra.mxu0 %v39
    %1018 = vmatprep.subr.mxu0 0.0
    %1019 = vmatpush1.msra.mxu0 %v38
    %1020 = vmatprep.subr.mxu0 0.0
    %1021 = vmatpush1.msra.mxu0 %v37
    %1022 = vmatprep.subr.mxu0 0.0
    %1023 = vmatpush1.msra.mxu0 %v36
    %1024 = vmatprep.subr.mxu0 0.0
    %1025 = vmatpush1.msra.mxu0 %v35
    %1026 = vmatprep.subr.mxu0 0.0
    %1027 = vmatpush1.msra.mxu0 %v34
    %1028 = vmatprep.subr.mxu0 0.0
    %1029 = vmatpush1.msra.mxu0 %v33
    %1030 = vmatprep.subr.mxu0 0.0
    %1031 = vmatpush1.msra.mxu0 %v32
    %1032 = vmatprep.subr.mxu0 0.0
    %1033 = vmatpush1.msra.mxu0 %v31
    %1034 = vmatprep.subr.mxu0 0.0
    %1035 = vmatpush1.msra.mxu0 %v30
    %1036 = vmatprep.subr.mxu0 0.0
    %1037 = vmatpush1.msra.mxu0 %v29
    %1038 = vmatprep.subr.mxu0 0.0
    %1039 = vmatpush2.msra.mxu0 %v60
    %1040 = vmatprep.subr.mxu0 0.0
    %1041 = vmatpush2.msra.mxu0 %v59
    %1042 = vmatprep.subr.mxu0 0.0
    %1043 = vmatpush2.msra.mxu0 %v58
    %1044 = vmatprep.subr.mxu0 0.0
    %1045 = vmatpush2.msra.mxu0 %v57
    %1046 = vmatprep.subr.mxu0 0.0
    %1047 = vmatpush2.msra.mxu0 %v56
    %1048 = vmatprep.subr.mxu0 0.0
    %1049 = vmatpush2.msra.mxu0 %v55
    %1050 = vmatprep.subr.mxu0 0.0
    %1051 = vmatpush2.msra.mxu0 %v54
    %1052 = vmatprep.subr.mxu0 0.0
    %1053 = vmatpush2.msra.mxu0 %v53
    %1054 = vmatprep.subr.mxu0 0.0
    %1055 = vmatpush2.msra.mxu0 %v52
    %1056 = vmatprep.subr.mxu0 0.0
    %1057 = vmatpush2.msra.mxu0 %v51
    %1058 = vmatprep.subr.mxu0 0.0
    %1059 = vmatpush2.msra.mxu0 %v50
    %1060 = vmatprep.subr.mxu0 0.0
    %1061 = vmatpush2.msra.mxu0 %v49
    %1062 = vmatprep.subr.mxu0 0.0
    %1063 = vmatpush2.msra.mxu0 %v48
    %1064 = vmatprep.subr.mxu0 0.0
    %1065 = vmatpush2.msra.mxu0 %v47
    %1066 = vmatprep.subr.mxu0 0.0
    %1067 = vmatpush2.msra.mxu0 %v46
    %1068 = vmatprep.subr.mxu0 0.0
    %1069 = vmatpush2.msra.mxu0 %v45
    %1070 = vmatprep.mubr.f32.mxu0 %v926
    %1071 = vmatmul.mubr.f32.gmra.mxu0 %v925
    %v1072 = vpop.f32.mrf.mxu0
    %v1073 = vadd.f32 %v1003, %v1072
    %v1074 = vpop.f32.mrf.mxu0
    %1075 = vdwg.mxu0
    %v1076 = vmax.f32 %v1073, 0.0
    %1077 = vset.pattern.permute.xlu0 5
    %1078 = vperm.xlu0 %1077, %v229
    %v1079 = vpop.permute.xlu0 %1078
    %v1081 = vmul.f32 %v1076, %v1079
    %1083 = vrot.lane.b32.xlu0 %v1081, 32
    %v1084 = vpop.permute.xlu0 %1083
    %1086 = vst.msk [vmem:[#allocation2 + $0x8] sm:$0xff] %vm407, %v1084
    %v1087 = vadd.f32 %v917, %v1081
    %1088 = vset.pattern.permute.xlu0 6
    %1089 = vperm.xlu0 %1088, %v27
    %v1090 = vpop.permute.xlu0 %1089
    %vm1091 = vcmp.eq.s32.totalorder %v66, %v1090
    %vm1092 = vcmp.eq.s32.totalorder %v67, %v1090
    %v1093 = vsel %vm1091, 1, 0
    %v1094 = vsel %vm1092, 1, 0
    %v1095 = vcvt.s32.f32 %v1093
    %v1096 = vcvt.s32.f32 %v1094
    %1097 = vset.pattern.permute.xlu0 6
    %1098 = vperm.xlu0 %1097, %v28
    %v1099 = vpop.permute.xlu0 %1098
    %vm1100 = vcmp.eq.s32.totalorder %v66, %v1099
    %v1101 = vsel %vm1100, 1, 0
    %v1102 = vcvt.s32.f32 %v1101
    %v1104 = vsel %vm83, %v1102, 0
    %1106 = vmatprep.subr.mxu0 0.0
    %1107 = vmatpush1.msra.mxu0 0.0
    %1108 = vmatprep.subr.mxu0 0.0
    %1109 = vmatpush1.msra.mxu0 0.0
    %1110 = vmatprep.subr.mxu0 0.0
    %1111 = vmatpush1.msra.mxu0 0.0
    %1112 = vmatprep.subr.mxu0 0.0
    %1113 = vmatpush1.msra.mxu0 0.0
    %1114 = vmatprep.subr.mxu0 0.0
    %1115 = vmatpush1.msra.mxu0 0.0
    %1116 = vmatprep.subr.mxu0 0.0
    %1117 = vmatpush1.msra.mxu0 0.0
    %1118 = vmatprep.subr.mxu0 0.0
    %1119 = vmatpush1.msra.mxu0 0.0
    %1120 = vmatprep.subr.mxu0 0.0
    %1121 = vmatpush1.msra.mxu0 0.0
    %1122 = vmatprep.subr.mxu0 0.0
    %1123 = vmatpush1.msra.mxu0 0.0
    %1124 = vmatprep.subr.mxu0 0.0
    %1125 = vmatpush1.msra.mxu0 0.0
    %1126 = vmatprep.subr.mxu0 0.0
    %1127 = vmatpush1.msra.mxu0 0.0
    %1128 = vmatprep.subr.mxu0 0.0
    %1129 = vmatpush1.msra.mxu0 0.0
    %1130 = vmatprep.subr.mxu0 0.0
    %1131 = vmatpush1.msra.mxu0 %v64
    %1132 = vmatprep.subr.mxu0 0.0
    %1133 = vmatpush1.msra.mxu0 %v63
    %1134 = vmatprep.subr.mxu0 0.0
    %1135 = vmatpush1.msra.mxu0 %v62
    %1136 = vmatprep.subr.mxu0 0.0
    %1137 = vmatpush1.msra.mxu0 %v61
    %1138 = vmatprep.subr.mxu0 0.0
    %1139 = vmatpush2.msra.mxu0 0.0
    %1140 = vmatprep.subr.mxu0 0.0
    %1141 = vmatpush2.msra.mxu0 0.0
    %1142 = vmatprep.subr.mxu0 0.0
    %1143 = vmatpush2.msra.mxu0 0.0
    %1144 = vmatprep.subr.mxu0 0.0
    %1145 = vmatpush2.msra.mxu0 0.0
    %1146 = vmatprep.subr.mxu0 0.0
    %1147 = vmatpush2.msra.mxu0 0.0
    %1148 = vmatprep.subr.mxu0 0.0
    %1149 = vmatpush2.msra.mxu0 0.0
    %1150 = vmatprep.subr.mxu0 0.0
    %1151 = vmatpush2.msra.mxu0 0.0
    %1152 = vmatprep.subr.mxu0 0.0
    %1153 = vmatpush2.msra.mxu0 0.0
    %1154 = vmatprep.subr.mxu0 0.0
    %1155 = vmatpush2.msra.mxu0 0.0
    %1156 = vmatprep.subr.mxu0 0.0
    %1157 = vmatpush2.msra.mxu0 0.0
    %1158 = vmatprep.subr.mxu0 0.0
    %1159 = vmatpush2.msra.mxu0 0.0
    %1160 = vmatprep.subr.mxu0 0.0
    %1161 = vmatpush2.msra.mxu0 0.0
    %1162 = vmatprep.subr.mxu0 0.0
    %1163 = vmatpush2.msra.mxu0 0.0
    %1164 = vmatprep.subr.mxu0 0.0
    %1165 = vmatpush2.msra.mxu0 0.0
    %1166 = vmatprep.subr.mxu0 0.0
    %1167 = vmatpush2.msra.mxu0 0.0
    %1168 = vmatprep.subr.mxu0 0.0
    %1169 = vmatpush2.msra.mxu0 0.0
    %1170 = vmatprep.mubr.f32.mxu0 0.0
    %1171 = vmatmul.mubr.f32.gmra.mxu0 %v1104
    %v1172 = vpop.f32.mrf.mxu0
    %v1173 = vadd.f32 0.0, %v1172
    %v1174 = vpop.f32.mrf.mxu0
    %1175 = vdwg.mxu0
    %1176 = vmatprep.subr.mxu0 0.0
    %1177 = vmatpush1.msra.mxu0 %v44
    %1178 = vmatprep.subr.mxu0 0.0
    %1179 = vmatpush1.msra.mxu0 %v43
    %1180 = vmatprep.subr.mxu0 0.0
    %1181 = vmatpush1.msra.mxu0 %v42
    %1182 = vmatprep.subr.mxu0 0.0
    %1183 = vmatpush1.msra.mxu0 %v41
    %1184 = vmatprep.subr.mxu0 0.0
    %1185 = vmatpush1.msra.mxu0 %v40
    %1186 = vmatprep.subr.mxu0 0.0
    %1187 = vmatpush1.msra.mxu0 %v39
    %1188 = vmatprep.subr.mxu0 0.0
    %1189 = vmatpush1.msra.mxu0 %v38
    %1190 = vmatprep.subr.mxu0 0.0
    %1191 = vmatpush1.msra.mxu0 %v37
    %1192 = vmatprep.subr.mxu0 0.0
    %1193 = vmatpush1.msra.mxu0 %v36
    %1194 = vmatprep.subr.mxu0 0.0
    %1195 = vmatpush1.msra.mxu0 %v35
    %1196 = vmatprep.subr.mxu0 0.0
    %1197 = vmatpush1.msra.mxu0 %v34
    %1198 = vmatprep.subr.mxu0 0.0
    %1199 = vmatpush1.msra.mxu0 %v33
    %1200 = vmatprep.subr.mxu0 0.0
    %1201 = vmatpush1.msra.mxu0 %v32
    %1202 = vmatprep.subr.mxu0 0.0
    %1203 = vmatpush1.msra.mxu0 %v31
    %1204 = vmatprep.subr.mxu0 0.0
    %1205 = vmatpush1.msra.mxu0 %v30
    %1206 = vmatprep.subr.mxu0 0.0
    %1207 = vmatpush1.msra.mxu0 %v29
    %1208 = vmatprep.subr.mxu0 0.0
    %1209 = vmatpush2.msra.mxu0 %v60
    %1210 = vmatprep.subr.mxu0 0.0
    %1211 = vmatpush2.msra.mxu0 %v59
    %1212 = vmatprep.subr.mxu0 0.0
    %1213 = vmatpush2.msra.mxu0 %v58
    %1214 = vmatprep.subr.mxu0 0.0
    %1215 = vmatpush2.msra.mxu0 %v57
    %1216 = vmatprep.subr.mxu0 0.0
    %1217 = vmatpush2.msra.mxu0 %v56
    %1218 = vmatprep.subr.mxu0 0.0
    %1219 = vmatpush2.msra.mxu0 %v55
    %1220 = vmatprep.subr.mxu0 0.0
    %1221 = vmatpush2.msra.mxu0 %v54
    %1222 = vmatprep.subr.mxu0 0.0
    %1223 = vmatpush2.msra.mxu0 %v53
    %1224 = vmatprep.subr.mxu0 0.0
    %1225 = vmatpush2.msra.mxu0 %v52
    %1226 = vmatprep.subr.mxu0 0.0
    %1227 = vmatpush2.msra.mxu0 %v51
    %1228 = vmatprep.subr.mxu0 0.0
    %1229 = vmatpush2.msra.mxu0 %v50
    %1230 = vmatprep.subr.mxu0 0.0
    %1231 = vmatpush2.msra.mxu0 %v49
    %1232 = vmatprep.subr.mxu0 0.0
    %1233 = vmatpush2.msra.mxu0 %v48
    %1234 = vmatprep.subr.mxu0 0.0
    %1235 = vmatpush2.msra.mxu0 %v47
    %1236 = vmatprep.subr.mxu0 0.0
    %1237 = vmatpush2.msra.mxu0 %v46
    %1238 = vmatprep.subr.mxu0 0.0
    %1239 = vmatpush2.msra.mxu0 %v45
    %1240 = vmatprep.mubr.f32.mxu0 %v1096
    %1241 = vmatmul.mubr.f32.gmra.mxu0 %v1095
    %v1242 = vpop.f32.mrf.mxu0
    %v1243 = vadd.f32 %v1173, %v1242
    %v1244 = vpop.f32.mrf.mxu0
    %1245 = vdwg.mxu0
    %v1246 = vmax.f32 %v1243, 0.0
    %1247 = vset.pattern.permute.xlu0 6
    %1248 = vperm.xlu0 %1247, %v229
    %v1249 = vpop.permute.xlu0 %1248
    %v1251 = vmul.f32 %v1246, %v1249
    %1253 = vrot.lane.b32.xlu0 %v1251, 64
    %v1254 = vpop.permute.xlu0 %1253
    %1256 = vst.msk [vmem:[#allocation2 + $0x8] sm:$0xff] %vm578, %v1254
    %v1257 = vadd.f32 %v1087, %v1251
    %1258 = vset.pattern.permute.xlu0 7
    %1259 = vperm.xlu0 %1258, %v27
    %v1260 = vpop.permute.xlu0 %1259
    %vm1261 = vcmp.eq.s32.totalorder %v66, %v1260
    %vm1262 = vcmp.eq.s32.totalorder %v67, %v1260
    %v1263 = vsel %vm1261, 1, 0
    %v1264 = vsel %vm1262, 1, 0
    %v1265 = vcvt.s32.f32 %v1263
    %v1266 = vcvt.s32.f32 %v1264
    %1267 = vset.pattern.permute.xlu0 7
    %1268 = vperm.xlu0 %1267, %v28
    %v1269 = vpop.permute.xlu0 %1268
    %vm1270 = vcmp.eq.s32.totalorder %v66, %v1269
    %v1271 = vsel %vm1270, 1, 0
    %v1272 = vcvt.s32.f32 %v1271
    %v1274 = vsel %vm83, %v1272, 0
    %1276 = vmatprep.subr.mxu0 0.0
    %1277 = vmatpush1.msra.mxu0 0.0
    %1278 = vmatprep.subr.mxu0 0.0
    %1279 = vmatpush1.msra.mxu0 0.0
    %1280 = vmatprep.subr.mxu0 0.0
    %1281 = vmatpush1.msra.mxu0 0.0
    %1282 = vmatprep.subr.mxu0 0.0
    %1283 = vmatpush1.msra.mxu0 0.0
    %1284 = vmatprep.subr.mxu0 0.0
    %1285 = vmatpush1.msra.mxu0 0.0
    %1286 = vmatprep.subr.mxu0 0.0
    %1287 = vmatpush1.msra.mxu0 0.0
    %1288 = vmatprep.subr.mxu0 0.0
    %1289 = vmatpush1.msra.mxu0 0.0
    %1290 = vmatprep.subr.mxu0 0.0
    %1291 = vmatpush1.msra.mxu0 0.0
    %1292 = vmatprep.subr.mxu0 0.0
    %1293 = vmatpush1.msra.mxu0 0.0
    %1294 = vmatprep.subr.mxu0 0.0
    %1295 = vmatpush1.msra.mxu0 0.0
    %1296 = vmatprep.subr.mxu0 0.0
    %1297 = vmatpush1.msra.mxu0 0.0
    %1298 = vmatprep.subr.mxu0 0.0
    %1299 = vmatpush1.msra.mxu0 0.0
    %1300 = vmatprep.subr.mxu0 0.0
    %1301 = vmatpush1.msra.mxu0 %v64
    %1302 = vmatprep.subr.mxu0 0.0
    %1303 = vmatpush1.msra.mxu0 %v63
    %1304 = vmatprep.subr.mxu0 0.0
    %1305 = vmatpush1.msra.mxu0 %v62
    %1306 = vmatprep.subr.mxu0 0.0
    %1307 = vmatpush1.msra.mxu0 %v61
    %1308 = vmatprep.subr.mxu0 0.0
    %1309 = vmatpush2.msra.mxu0 0.0
    %1310 = vmatprep.subr.mxu0 0.0
    %1311 = vmatpush2.msra.mxu0 0.0
    %1312 = vmatprep.subr.mxu0 0.0
    %1313 = vmatpush2.msra.mxu0 0.0
    %1314 = vmatprep.subr.mxu0 0.0
    %1315 = vmatpush2.msra.mxu0 0.0
    %1316 = vmatprep.subr.mxu0 0.0
    %1317 = vmatpush2.msra.mxu0 0.0
    %1318 = vmatprep.subr.mxu0 0.0
    %1319 = vmatpush2.msra.mxu0 0.0
    %1320 = vmatprep.subr.mxu0 0.0
    %1321 = vmatpush2.msra.mxu0 0.0
    %1322 = vmatprep.subr.mxu0 0.0
    %1323 = vmatpush2.msra.mxu0 0.0
    %1324 = vmatprep.subr.mxu0 0.0
    %1325 = vmatpush2.msra.mxu0 0.0
    %1326 = vmatprep.subr.mxu0 0.0
    %1327 = vmatpush2.msra.mxu0 0.0
    %1328 = vmatprep.subr.mxu0 0.0
    %1329 = vmatpush2.msra.mxu0 0.0
    %1330 = vmatprep.subr.mxu0 0.0
    %1331 = vmatpush2.msra.mxu0 0.0
    %1332 = vmatprep.subr.mxu0 0.0
    %1333 = vmatpush2.msra.mxu0 0.0
    %1334 = vmatprep.subr.mxu0 0.0
    %1335 = vmatpush2.msra.mxu0 0.0
    %1336 = vmatprep.subr.mxu0 0.0
    %1337 = vmatpush2.msra.mxu0 0.0
    %1338 = vmatprep.subr.mxu0 0.0
    %1339 = vmatpush2.msra.mxu0 0.0
    %1340 = vmatprep.mubr.f32.mxu0 0.0
    %1341 = vmatmul.mubr.f32.gmra.mxu0 %v1274
    %v1342 = vpop.f32.mrf.mxu0
    %v1343 = vadd.f32 0.0, %v1342
    %v1344 = vpop.f32.mrf.mxu0
    %1345 = vdwg.mxu0
    %1346 = vmatprep.subr.mxu0 0.0
    %1347 = vmatpush1.msra.mxu0 %v44
    %1348 = vmatprep.subr.mxu0 0.0
    %1349 = vmatpush1.msra.mxu0 %v43
    %1350 = vmatprep.subr.mxu0 0.0
    %1351 = vmatpush1.msra.mxu0 %v42
    %1352 = vmatprep.subr.mxu0 0.0
    %1353 = vmatpush1.msra.mxu0 %v41
    %1354 = vmatprep.subr.mxu0 0.0
    %1355 = vmatpush1.msra.mxu0 %v40
    %1356 = vmatprep.subr.mxu0 0.0
    %1357 = vmatpush1.msra.mxu0 %v39
    %1358 = vmatprep.subr.mxu0 0.0
    %1359 = vmatpush1.msra.mxu0 %v38
    %1360 = vmatprep.subr.mxu0 0.0
    %1361 = vmatpush1.msra.mxu0 %v37
    %1362 = vmatprep.subr.mxu0 0.0
    %1363 = vmatpush1.msra.mxu0 %v36
    %1364 = vmatprep.subr.mxu0 0.0
    %1365 = vmatpush1.msra.mxu0 %v35
    %1366 = vmatprep.subr.mxu0 0.0
    %1367 = vmatpush1.msra.mxu0 %v34
    %1368 = vmatprep.subr.mxu0 0.0
    %1369 = vmatpush1.msra.mxu0 %v33
    %1370 = vmatprep.subr.mxu0 0.0
    %1371 = vmatpush1.msra.mxu0 %v32
    %1372 = vmatprep.subr.mxu0 0.0
    %1373 = vmatpush1.msra.mxu0 %v31
    %1374 = vmatprep.subr.mxu0 0.0
    %1375 = vmatpush1.msra.mxu0 %v30
    %1376 = vmatprep.subr.mxu0 0.0
    %1377 = vmatpush1.msra.mxu0 %v29
    %1378 = vmatprep.subr.mxu0 0.0
    %1379 = vmatpush2.msra.mxu0 %v60
    %1380 = vmatprep.subr.mxu0 0.0
    %1381 = vmatpush2.msra.mxu0 %v59
    %1382 = vmatprep.subr.mxu0 0.0
    %1383 = vmatpush2.msra.mxu0 %v58
    %1384 = vmatprep.subr.mxu0 0.0
    %1385 = vmatpush2.msra.mxu0 %v57
    %1386 = vmatprep.subr.mxu0 0.0
    %1387 = vmatpush2.msra.mxu0 %v56
    %1388 = vmatprep.subr.mxu0 0.0
    %1389 = vmatpush2.msra.mxu0 %v55
    %1390 = vmatprep.subr.mxu0 0.0
    %1391 = vmatpush2.msra.mxu0 %v54
    %1392 = vmatprep.subr.mxu0 0.0
    %1393 = vmatpush2.msra.mxu0 %v53
    %1394 = vmatprep.subr.mxu0 0.0
    %1395 = vmatpush2.msra.mxu0 %v52
    %1396 = vmatprep.subr.mxu0 0.0
    %1397 = vmatpush2.msra.mxu0 %v51
    %1398 = vmatprep.subr.mxu0 0.0
    %1399 = vmatpush2.msra.mxu0 %v50
    %1400 = vmatprep.subr.mxu0 0.0
    %1401 = vmatpush2.msra.mxu0 %v49
    %1402 = vmatprep.subr.mxu0 0.0
    %1403 = vmatpush2.msra.mxu0 %v48
    %1404 = vmatprep.subr.mxu0 0.0
    %1405 = vmatpush2.msra.mxu0 %v47
    %1406 = vmatprep.subr.mxu0 0.0
    %1407 = vmatpush2.msra.mxu0 %v46
    %1408 = vmatprep.subr.mxu0 0.0
    %1409 = vmatpush2.msra.mxu0 %v45
    %1410 = vmatprep.mubr.f32.mxu0 %v1266
    %1411 = vmatmul.mubr.f32.gmra.mxu0 %v1265
    %v1412 = vpop.f32.mrf.mxu0
    %v1413 = vadd.f32 %v1343, %v1412
    %v1414 = vpop.f32.mrf.mxu0
    %1415 = vdwg.mxu0
    %v1416 = vmax.f32 %v1413, 0.0
    %1417 = vset.pattern.permute.xlu0 7
    %1418 = vperm.xlu0 %1417, %v229
    %v1419 = vpop.permute.xlu0 %1418
    %v1421 = vmul.f32 %v1416, %v1419
    %1423 = vrot.lane.b32.xlu0 %v1421, 96
    %v1424 = vpop.permute.xlu0 %1423
    %1426 = vst.msk [vmem:[#allocation2 + $0x8] sm:$0xff] %vm749, %v1424
    %v1427 = vadd.f32 %v1257, %v1421
    %v1428 = vld [vmem:[%s4] sm:$0xff]
    %v1429 = vld [vmem:[%s4 + $0x8] sm:$0xff]
    %v1430 = vld [vmem:[%s4 + $0x10] sm:$0xff]
    %v1431 = vld [vmem:[%s4 + $0x18] sm:$0xff]
    %v1432 = vld [vmem:[%s5] sm:$0x1]
    %v1434 = vlaneseq
    %v1435 = vshrl.u32 %v1434, 7
    %v1436 = vsub.s32 0, %v1435
    %v1437 = vrot.slane %v1432, %v1436
    %v1440 = vsel %vm83, %v1427, 0
    %1442 = vmatprep.subr.mxu0 0.0
    %1443 = vmatpush1.msra.mxu0 0.0
    %1444 = vmatprep.subr.mxu0 0.0
    %1445 = vmatpush1.msra.mxu0 0.0
    %1446 = vmatprep.subr.mxu0 0.0
    %1447 = vmatpush1.msra.mxu0 0.0
    %1448 = vmatprep.subr.mxu0 0.0
    %1449 = vmatpush1.msra.mxu0 0.0
    %1450 = vmatprep.subr.mxu0 0.0
    %1451 = vmatpush1.msra.mxu0 0.0
    %1452 = vmatprep.subr.mxu0 0.0
    %1453 = vmatpush1.msra.mxu0 0.0
    %1454 = vmatprep.subr.mxu0 0.0
    %1455 = vmatpush1.msra.mxu0 0.0
    %1456 = vmatprep.subr.mxu0 0.0
    %1457 = vmatpush1.msra.mxu0 0.0
    %1458 = vmatprep.subr.mxu0 0.0
    %1459 = vmatpush1.msra.mxu0 0.0
    %1460 = vmatprep.subr.mxu0 0.0
    %1461 = vmatpush1.msra.mxu0 0.0
    %1462 = vmatprep.subr.mxu0 0.0
    %1463 = vmatpush1.msra.mxu0 0.0
    %1464 = vmatprep.subr.mxu0 0.0
    %1465 = vmatpush1.msra.mxu0 0.0
    %1466 = vmatprep.subr.mxu0 0.0
    %1467 = vmatpush1.msra.mxu0 %v1431
    %1468 = vmatprep.subr.mxu0 0.0
    %1469 = vmatpush1.msra.mxu0 %v1430
    %1470 = vmatprep.subr.mxu0 0.0
    %1471 = vmatpush1.msra.mxu0 %v1429
    %1472 = vmatprep.subr.mxu0 0.0
    %1473 = vmatpush1.msra.mxu0 %v1428
    %1474 = vmatprep.subr.mxu0 0.0
    %1475 = vmatpush2.msra.mxu0 0.0
    %1476 = vmatprep.subr.mxu0 0.0
    %1477 = vmatpush2.msra.mxu0 0.0
    %1478 = vmatprep.subr.mxu0 0.0
    %1479 = vmatpush2.msra.mxu0 0.0
    %1480 = vmatprep.subr.mxu0 0.0
    %1481 = vmatpush2.msra.mxu0 0.0
    %1482 = vmatprep.subr.mxu0 0.0
    %1483 = vmatpush2.msra.mxu0 0.0
    %1484 = vmatprep.subr.mxu0 0.0
    %1485 = vmatpush2.msra.mxu0 0.0
    %1486 = vmatprep.subr.mxu0 0.0
    %1487 = vmatpush2.msra.mxu0 0.0
    %1488 = vmatprep.subr.mxu0 0.0
    %1489 = vmatpush2.msra.mxu0 0.0
    %1490 = vmatprep.subr.mxu0 0.0
    %1491 = vmatpush2.msra.mxu0 0.0
    %1492 = vmatprep.subr.mxu0 0.0
    %1493 = vmatpush2.msra.mxu0 0.0
    %1494 = vmatprep.subr.mxu0 0.0
    %1495 = vmatpush2.msra.mxu0 0.0
    %1496 = vmatprep.subr.mxu0 0.0
    %1497 = vmatpush2.msra.mxu0 0.0
    %1498 = vmatprep.subr.mxu0 0.0
    %1499 = vmatpush2.msra.mxu0 0.0
    %1500 = vmatprep.subr.mxu0 0.0
    %1501 = vmatpush2.msra.mxu0 0.0
    %1502 = vmatprep.subr.mxu0 0.0
    %1503 = vmatpush2.msra.mxu0 0.0
    %1504 = vmatprep.subr.mxu0 0.0
    %1505 = vmatpush2.msra.mxu0 0.0
    %1506 = vmatprep.mubr.f32.mxu0 0.0
    %1507 = vmatmul.mubr.f32.gmra.mxu0 %v1440
    %v1508 = vpop.f32.mrf.mxu0
    %v1509 = vadd.f32 %v1437, %v1508
    %v1510 = vpop.f32.mrf.mxu0
    %1511 = vdwg.mxu0
    %v1512 = vmax.f32 %v1509, 0.0
    %1513 = vst.msk [vmem:[#allocation4] sm:$0xff] %vm83, %v1512
    // Predicated region
    $region26: #{tpu_custom_call.1} parent=1 // pred_check
      _
    $region27: #{tpu_custom_call.1} parent=1 // pred_check_branch
      %1515 = sbr.rel (0) target = $region29
    $region28: #{tpu_custom_call.1} parent=1 // pred_region
      %s1517 = ssub.s32 256, 256
      %1518 = vsyncadd [#allocation3], %s1517
      %s1520 = sshll.u32 [#allocation2], 4
      %s1521 = int_to_ptr.vmem [resolvable:$true] %s1520
      %1523 = dma.vmem_to_hbm [thread:$0]  %s1521, 256, %s6, [#allocation3]
    $region29: #{tpu_custom_call.1} parent=1 // pred_fallthru
      _
    // Predicated region
    $region30: #{tpu_custom_call.1} parent=1 // pred_check
      _
    $region31: #{tpu_custom_call.1} parent=1 // pred_check_branch
      %1525 = sbr.rel (0) target = $region33
    $region32: #{tpu_custom_call.1} parent=1 // pred_region
      %s1527 = ssub.s32 128, 128
      %1528 = vsyncadd [#allocation5], %s1527
      %s1530 = sshll.u32 [#allocation4], 4
      %s1531 = int_to_ptr.vmem [resolvable:$true] %s1530
      %1533 = dma.vmem_to_hbm [thread:$0]  %s1531, 128, %s7, [#allocation5]
    $region33: #{tpu_custom_call.1} parent=1 // pred_fallthru
      _
    // Predicated region
    $region34: #{tpu_custom_call.1} parent=1 // pred_check
      _
    $region35: #{tpu_custom_call.1} parent=1 // pred_check_branch
      %1535 = sbr.rel (0) target = $region37
    $region36: #{tpu_custom_call.1} parent=1 // pred_region
      %1536 = dma.done [#allocation3], 256
    $region37: #{tpu_custom_call.1} parent=1 // pred_fallthru
      _
    // Predicated region
    $region38: #{tpu_custom_call.1} parent=1 // pred_check
      _
    $region39: #{tpu_custom_call.1} parent=1 // pred_check_branch
      %1538 = sbr.rel (0) target = $region41
    $region40: #{tpu_custom_call.1} parent=1 // pred_region
      %1539 = dma.done [#allocation5], 128
    $region41: #{tpu_custom_call.1} parent=1 // pred_fallthru
      _
    %1540 = vsyncpa [#allocation3], 1
    %1541 = vsyncpa [#allocation5], 1

</llo_original>
